<compile_context>
chip_gen: v7x
topology: tpu7x:2x2x1
jax: 0.10.0
libtpu: 0.0.40
codegen_flags: <defaults>
</compile_context>

<pallas_src>
import functools

import jax
import jax.numpy as jnp
import numpy as np
from jax.experimental import pallas as pl
from jax.experimental.pallas import tpu as pltpu


# ---------------------------------------------------------------------------
# Pallas kernel: one batch element per grid step, everything resident in VMEM.
# ---------------------------------------------------------------------------

def _mha_kernel(x_ref, y_ref, wq_ref, bq_ref, wkv_ref, bkv_ref, wo_ref, bo_ref,
                *rest, num_heads, scale, with_mask):
    if with_mask:
        bias_ref, out_ref, attn_ref = rest
    else:
        out_ref, attn_ref = rest

    n, c = x_ref.shape[1], x_ref.shape[2]
    m = y_ref.shape[1]
    hd = c // num_heads
    in_dt = x_ref.dtype

    x = x_ref[0]        # (n, c)  bf16
    yv = y_ref[0]       # (m, d)  bf16

    # --- Q / KV projections: bf16 operands straight into the MXU, f32 accumulate.
    q = jnp.dot(x, wq_ref[...], preferred_element_type=jnp.float32)
    q = q + bq_ref[...].astype(jnp.float32)                        # (n, c)  f32

    kv = jnp.dot(yv, wkv_ref[...], preferred_element_type=jnp.float32)
    kv = kv + bkv_ref[...].astype(jnp.float32)                     # (m, 2c) f32

    # reshape(b, m, 2, h, hd): keys = first c columns, values = last c columns.
    k = kv[:, :c]
    v = kv[:, c:]

    # Cast once back to the input dtype for the attention matmuls (matches the
    # PyTorch dtype semantics: linear outputs are bf16 going into the einsums).
    q_b = q.astype(in_dt)
    k_b = k.astype(in_dt)
    v_b = v.astype(in_dt)
    wo = wo_ref[...]                                               # (c, c)  bf16

    bias = bias_ref[0].astype(jnp.float32) if with_mask else None  # (n, m)

    out_acc = jnp.zeros((n, c), jnp.float32)
    for h in range(num_heads):                      # static, small head count
        lo = h * hd
        qh = q_b[:, lo:lo + hd]                     # (n, hd)
        kh = k_b[:, lo:lo + hd]                     # (m, hd)
        vh = v_b[:, lo:lo + hd]                     # (m, hd)

        # scores: q_h @ k_h^T  (contract head dim; no explicit transpose needed)
        s = jax.lax.dot_general(
            qh, kh, (((1,), (1,)), ((), ())),
            preferred_element_type=jnp.float32) * scale            # (n, m) f32
        if with_mask:
            s = s + bias

        # softmax over keys (f32), denominator via EUP reciprocal.
        s = s - jnp.max(s, axis=-1, keepdims=True)
        p = jnp.exp(s)
        p = p * pl.reciprocal(jnp.sum(p, axis=-1, keepdims=True), approx=True)

        attn_ref[0, h] = p.astype(attn_ref.dtype)                  # (n, m)

        # context and its contribution to the output projection:
        #   out = concat_h(ctx_h) @ Wo  ==  sum_h  ctx_h @ Wo[h*hd:(h+1)*hd, :]
        ctx = jnp.dot(p.astype(in_dt), vh,
                      preferred_element_type=jnp.float32)          # (n, hd) f32
        out_acc = out_acc + jnp.dot(ctx.astype(in_dt), wo[lo:lo + hd, :],
                                    preferred_element_type=jnp.float32)

    out_acc = out_acc + bo_ref[...].astype(jnp.float32)
    out_ref[0] = out_acc.astype(out_ref.dtype)


# ---------------------------------------------------------------------------
# Wrapper: pallas_call plumbing
# ---------------------------------------------------------------------------

def multi_head_attention(x, y=None, mask=None, *, params, num_heads):
    """Returns (out, attention) matching the PyTorch module (attention is (b,n,m,h))."""
    if y is None:
        y = x
    b, n, c = x.shape
    _, m, d = y.shape
    hd = c // num_heads
    scale = float(hd) ** (-0.5)

    bq = params["bq"].reshape(1, c)
    bkv = params["bkv"].reshape(1, 2 * c)
    bo = params["bo"].reshape(1, c)

    inputs = [x, y, params["wq"], bq, params["wkv"], bkv, params["wo"], bo]
    in_specs = [
        pl.BlockSpec((1, n, c), lambda i: (i, 0, 0)),
        pl.BlockSpec((1, m, d), lambda i: (i, 0, 0)),
        pl.BlockSpec((c, c), lambda i: (0, 0)),
        pl.BlockSpec((1, c), lambda i: (0, 0)),
        pl.BlockSpec((d, 2 * c), lambda i: (0, 0)),
        pl.BlockSpec((1, 2 * c), lambda i: (0, 0)),
        pl.BlockSpec((c, c), lambda i: (0, 0)),
        pl.BlockSpec((1, c), lambda i: (0, 0)),
    ]

    with_mask = mask is not None
    if with_mask:
        if mask.ndim == 2:                       # (b, m) -> broadcast over queries
            mask3 = jnp.broadcast_to(mask[:, None, :], (b, n, m))
        else:                                    # (b, n, m)
            mask3 = mask
        # additive bias: large negative where masked (exp underflows to 0)
        bias = jnp.where(mask3, jnp.float32(-1e30), jnp.float32(0.0))
        inputs.append(bias)
        in_specs.append(pl.BlockSpec((1, n, m), lambda i: (i, 0, 0)))

    kernel = functools.partial(_mha_kernel, num_heads=num_heads, scale=scale,
                               with_mask=with_mask)

    out, attn_hnm = pl.pallas_call(
        kernel,
        out_shape=(
            jax.ShapeDtypeStruct((b, n, c), x.dtype),
            jax.ShapeDtypeStruct((b, num_heads, n, m), x.dtype),
        ),
        grid=(b,),
        in_specs=in_specs,
        out_specs=(
            pl.BlockSpec((1, n, c), lambda i: (i, 0, 0)),
            pl.BlockSpec((1, num_heads, n, m), lambda i: (i, 0, 0, 0)),
        ),
        compiler_params=pltpu.CompilerParams(
            dimension_semantics=("parallel",)),    # batch items are independent
    )(*inputs)

    # PyTorch returns attention as (b, n, m, h); kernel writes lane-dense (b, h, n, m).
    attention = jnp.transpose(attn_hnm, (0, 2, 3, 1))
    return out, attention


# ---------------------------------------------------------------------------
# Pure-JAX reference (f32) for correctness checking
# ---------------------------------------------------------------------------

def mha_reference(x, y, mask, params, num_heads):
    xf = x.astype(jnp.float32)
    yf = y.astype(jnp.float32)
    b, n, c = x.shape
    m = y.shape[1]
    h = num_heads
    hd = c // h
    q = xf @ params["wq"].astype(jnp.float32) + params["bq"].astype(jnp.float32)
    kv = yf @ params["wkv"].astype(jnp.float32) + params["bkv"].astype(jnp.float32)
    q = q.reshape(b, n, h, hd)
    kv = kv.reshape(b, m, 2, h, hd)
    k, v = kv[:, :, 0], kv[:, :, 1]
    att = jnp.einsum('bnhd,bmhd->bnmh', q, k) * (hd ** -0.5)
    if mask is not None:
        if mask.ndim == 2:
            mask = mask[:, None, :]
        att = jnp.where(mask[..., None], -jnp.inf, att)
    att = jax.nn.softmax(att, axis=2)
    out = jnp.einsum('bnmh,bmhd->bnhd', att, v).reshape(b, n, c)
    out = out @ params["wo"].astype(jnp.float32) + params["bo"].astype(jnp.float32)
    return out, att


# ---------------------------------------------------------------------------
# Main
# ---------------------------------------------------------------------------

if __name__ == "__main__":
    B, N, M = 2, 8, 8           # batch, query length, key/value length
    DIM_SELF = 32               # c
    DIM_REF = 32                # d
    NUM_HEADS = 4               # head_dim = 8

    dt = jnp.bfloat16
    key = jax.random.PRNGKey(0)
    ks = jax.random.split(key, 10)

    def init_w(k, shape, fan_in):
        return (jax.random.normal(k, shape) / (fan_in ** 0.5)).astype(dt)

    params = {
        # nn.Linear weights (out,in) stored transposed (in,out) so y = x @ W + b.
        "wq":  init_w(ks[0], (DIM_SELF, DIM_SELF), DIM_SELF),
        "bq":  (jax.random.normal(ks[1], (DIM_SELF,)) * 0.1).astype(dt),
        "wkv": init_w(ks[2], (DIM_REF, 2 * DIM_SELF), DIM_REF),
        "bkv": (jax.random.normal(ks[3], (2 * DIM_SELF,)) * 0.1).astype(dt),
        "wo":  init_w(ks[4], (DIM_SELF, DIM_SELF), DIM_SELF),
        "bo":  (jax.random.normal(ks[5], (DIM_SELF,)) * 0.1).astype(dt),
    }

    x = jax.random.normal(ks[6], (B, N, DIM_SELF)).astype(dt)
    y = jax.random.normal(ks[7], (B, M, DIM_REF)).astype(dt)
    # 2-D key mask (b, m): mask out the last two key positions (never a full row).
    mask = jnp.broadcast_to(jnp.arange(M) >= (M - 2), (B, M))

    # self-attention, no mask (y defaults to x) + cross-attention with mask
    out_sa, attn_sa = multi_head_attention(x, None, None,
                                           params=params, num_heads=NUM_HEADS)
    out_ca, attn_ca = multi_head_attention(x, y, mask,
                                           params=params, num_heads=NUM_HEADS)
    jax.block_until_ready((out_sa, attn_sa, out_ca, attn_ca))

    assert out_sa.shape == (B, N, DIM_SELF)
    assert attn_sa.shape == (B, N, N, NUM_HEADS)
    assert out_ca.shape == (B, N, DIM_SELF)
    assert attn_ca.shape == (B, N, M, NUM_HEADS)

    # correctness vs pure-JAX f32 reference (bf16-level tolerances)
    ref_out_sa, ref_attn_sa = mha_reference(x, x, None, params, NUM_HEADS)
    ref_out_ca, ref_attn_ca = mha_reference(x, y, mask, params, NUM_HEADS)

    np.testing.assert_allclose(np.asarray(out_sa, np.float32),
                               np.asarray(ref_out_sa), atol=1e-1, rtol=0)
    np.testing.assert_allclose(np.asarray(attn_sa, np.float32),
                               np.asarray(ref_attn_sa), atol=3e-2, rtol=0)
    np.testing.assert_allclose(np.asarray(out_ca, np.float32),
                               np.asarray(ref_out_ca), atol=1e-1, rtol=0)
    np.testing.assert_allclose(np.asarray(attn_ca, np.float32),
                               np.asarray(ref_attn_ca), atol=3e-2, rtol=0)

    print("KERNEL_OK")
</pallas_src>

<mosaic_0001>
module attributes {stable_mosaic.version = 11 : i64} {
  func.func @_mha_kernel(%arg0: i32, %arg1: memref<1x8x32xbf16, #tpu.memory_space<vmem>>, %arg2: memref<1x8x32xbf16, #tpu.memory_space<vmem>>, %arg3: memref<32x32xbf16, #tpu.memory_space<vmem>>, %arg4: memref<1x32xbf16, #tpu.memory_space<vmem>>, %arg5: memref<32x64xbf16, #tpu.memory_space<vmem>>, %arg6: memref<1x64xbf16, #tpu.memory_space<vmem>>, %arg7: memref<32x32xbf16, #tpu.memory_space<vmem>>, %arg8: memref<1x32xbf16, #tpu.memory_space<vmem>>, %arg9: memref<1x8x32xbf16, #tpu.memory_space<vmem>>, %arg10: memref<1x4x8x8xbf16, #tpu.memory_space<vmem>>) attributes {dimension_semantics = [#tpu.dimension_semantics<parallel>], iteration_bounds = array<i64: 2>, scalar_prefetch = 0 : i64, scratch_operands = 0 : i64, tpu.core_type = #tpu.core_type<tc>, window_params = [{transform_indices = @transform_0, window_bounds = array<i64: 1, 8, 32>}, {transform_indices = @transform_1, window_bounds = array<i64: 1, 8, 32>}, {pipeline_mode = #tpu.pipeline_mode<synchronous>, transform_indices = @transform_2, window_bounds = array<i64: 32, 32>}, {pipeline_mode = #tpu.pipeline_mode<synchronous>, transform_indices = @transform_3, window_bounds = array<i64: 1, 32>}, {pipeline_mode = #tpu.pipeline_mode<synchronous>, transform_indices = @transform_4, window_bounds = array<i64: 32, 64>}, {pipeline_mode = #tpu.pipeline_mode<synchronous>, transform_indices = @transform_5, window_bounds = array<i64: 1, 64>}, {pipeline_mode = #tpu.pipeline_mode<synchronous>, transform_indices = @transform_6, window_bounds = array<i64: 32, 32>}, {pipeline_mode = #tpu.pipeline_mode<synchronous>, transform_indices = @transform_7, window_bounds = array<i64: 1, 32>}, {transform_indices = @transform_8, window_bounds = array<i64: 1, 8, 32>}, {transform_indices = @transform_9, window_bounds = array<i64: 1, 4, 8, 8>}]} {
    %c0 = arith.constant 0 : index
    %c0_0 = arith.constant 0 : index
    %c0_1 = arith.constant 0 : index
    %0 = vector.load %arg1[%c0, %c0_0, %c0_1] : memref<1x8x32xbf16, #tpu.memory_space<vmem>>, vector<1x8x32xbf16>
    %1 = vector.shape_cast %0 : vector<1x8x32xbf16> to vector<8x32xbf16>
    %c0_2 = arith.constant 0 : index
    %c0_3 = arith.constant 0 : index
    %c0_4 = arith.constant 0 : index
    %2 = vector.load %arg2[%c0_2, %c0_3, %c0_4] : memref<1x8x32xbf16, #tpu.memory_space<vmem>>, vector<1x8x32xbf16>
    %3 = vector.shape_cast %2 : vector<1x8x32xbf16> to vector<8x32xbf16>
    %c0_5 = arith.constant 0 : index
    %c0_6 = arith.constant 0 : index
    %4 = vector.load %arg3[%c0_5, %c0_6] : memref<32x32xbf16, #tpu.memory_space<vmem>>, vector<32x32xbf16>
    %cst = arith.constant dense<0.000000e+00> : vector<8x32xf32>
    %5 = tpu.matmul %1, %4, %cst {dimension_numbers = #tpu.dot_dimension_numbers<[1], [0], [0], [1], [0, 0, 1, 1], [], []>} : vector<8x32xbf16>, vector<32x32xbf16>, vector<8x32xf32> -> vector<8x32xf32>
    %c0_7 = arith.constant 0 : index
    %c0_8 = arith.constant 0 : index
    %6 = vector.load %arg4[%c0_7, %c0_8] : memref<1x32xbf16, #tpu.memory_space<vmem>>, vector<1x32xbf16>
    %7 = arith.extf %6 : vector<1x32xbf16> to vector<1x32xf32>
    %8 = vector.broadcast %7 : vector<1x32xf32> to vector<8x32xf32>
    %9 = arith.addf %5, %8 : vector<8x32xf32>
    %c0_9 = arith.constant 0 : index
    %c0_10 = arith.constant 0 : index
    %10 = vector.load %arg5[%c0_9, %c0_10] : memref<32x64xbf16, #tpu.memory_space<vmem>>, vector<32x64xbf16>
    %cst_11 = arith.constant dense<0.000000e+00> : vector<8x64xf32>
    %11 = tpu.matmul %3, %10, %cst_11 {dimension_numbers = #tpu.dot_dimension_numbers<[1], [0], [0], [1], [0, 0, 1, 1], [], []>} : vector<8x32xbf16>, vector<32x64xbf16>, vector<8x64xf32> -> vector<8x64xf32>
    %c0_12 = arith.constant 0 : index
    %c0_13 = arith.constant 0 : index
    %12 = vector.load %arg6[%c0_12, %c0_13] : memref<1x64xbf16, #tpu.memory_space<vmem>>, vector<1x64xbf16>
    %13 = arith.extf %12 : vector<1x64xbf16> to vector<1x64xf32>
    %14 = vector.broadcast %13 : vector<1x64xf32> to vector<8x64xf32>
    %15 = arith.addf %11, %14 : vector<8x64xf32>
    %16 = vector.extract_strided_slice %15 {offsets = [0, 0], sizes = [8, 32], strides = [1, 1]} : vector<8x64xf32> to vector<8x32xf32>
    %17 = vector.extract_strided_slice %15 {offsets = [0, 32], sizes = [8, 32], strides = [1, 1]} : vector<8x64xf32> to vector<8x32xf32>
    %18 = arith.truncf %9 : vector<8x32xf32> to vector<8x32xbf16>
    %19 = arith.truncf %16 : vector<8x32xf32> to vector<8x32xbf16>
    %20 = arith.truncf %17 : vector<8x32xf32> to vector<8x32xbf16>
    %c0_14 = arith.constant 0 : index
    %c0_15 = arith.constant 0 : index
    %21 = vector.load %arg7[%c0_14, %c0_15] : memref<32x32xbf16, #tpu.memory_space<vmem>>, vector<32x32xbf16>
    %cst_16 = arith.constant 0.000000e+00 : f32
    %22 = vector.broadcast %cst_16 : f32 to vector<8x32xf32>
    %23 = vector.extract_strided_slice %18 {offsets = [0, 0], sizes = [8, 8], strides = [1, 1]} : vector<8x32xbf16> to vector<8x8xbf16>
    %24 = vector.extract_strided_slice %19 {offsets = [0, 0], sizes = [8, 8], strides = [1, 1]} : vector<8x32xbf16> to vector<8x8xbf16>
    %25 = vector.extract_strided_slice %20 {offsets = [0, 0], sizes = [8, 8], strides = [1, 1]} : vector<8x32xbf16> to vector<8x8xbf16>
    %cst_17 = arith.constant dense<0.000000e+00> : vector<8x8xf32>
    %26 = tpu.matmul %23, %24, %cst_17 {dimension_numbers = #tpu.dot_dimension_numbers<[1], [1], [0], [0], [0, 0, 1, 0], [], []>} : vector<8x8xbf16>, vector<8x8xbf16>, vector<8x8xf32> -> vector<8x8xf32>
    %cst_18 = arith.constant 0.353553385 : f32
    %27 = vector.broadcast %cst_18 : f32 to vector<8x8xf32>
    %28 = arith.mulf %26, %27 : vector<8x8xf32>
    %cst_19 = arith.constant dense<0xFF800000> : vector<8xf32>
    %29 = vector.multi_reduction <maximumf>, %28, %cst_19 [1] : vector<8x8xf32> to vector<8xf32>
    %30 = vector.shape_cast %29 : vector<8xf32> to vector<8x1xf32>
    %31 = vector.broadcast %30 : vector<8x1xf32> to vector<8x8xf32>
    %32 = arith.subf %28, %31 : vector<8x8xf32>
    %33 = math.exp %32 : vector<8x8xf32>
    %cst_20 = arith.constant dense<0.000000e+00> : vector<8xf32>
    %34 = vector.multi_reduction <add>, %33, %cst_20 [1] : vector<8x8xf32> to vector<8xf32>
    %35 = vector.shape_cast %34 : vector<8xf32> to vector<8x1xf32>
    %36 = tpu.reciprocal %35 {approx = true} : vector<8x1xf32> -> vector<8x1xf32>
    %37 = vector.broadcast %36 : vector<8x1xf32> to vector<8x8xf32>
    %38 = arith.mulf %33, %37 : vector<8x8xf32>
    %39 = arith.truncf %38 : vector<8x8xf32> to vector<8x8xbf16>
    %c0_21 = arith.constant 0 : index
    %c0_22 = arith.constant 0 : index
    %c0_23 = arith.constant 0 : index
    %c0_24 = arith.constant 0 : index
    %40 = vector.load %arg10[%c0_21, %c0_22, %c0_23, %c0_24] : memref<1x4x8x8xbf16, #tpu.memory_space<vmem>>, vector<1x1x8x8xbf16>
    %41 = vector.shape_cast %40 : vector<1x1x8x8xbf16> to vector<8x8xbf16>
    %42 = vector.shape_cast %39 : vector<8x8xbf16> to vector<1x1x8x8xbf16>
    tpu.vector_store %arg10[%c0_21, %c0_22, %c0_23, %c0_24], %42 {strides = array<i32>} : memref<1x4x8x8xbf16, #tpu.memory_space<vmem>>, vector<1x1x8x8xbf16>,
    %43 = arith.truncf %38 : vector<8x8xf32> to vector<8x8xbf16>
    %cst_25 = arith.constant dense<0.000000e+00> : vector<8x8xf32>
    %44 = tpu.matmul %43, %25, %cst_25 {dimension_numbers = #tpu.dot_dimension_numbers<[1], [0], [0], [1], [0, 0, 1, 1], [], []>} : vector<8x8xbf16>, vector<8x8xbf16>, vector<8x8xf32> -> vector<8x8xf32>
    %45 = arith.truncf %44 : vector<8x8xf32> to vector<8x8xbf16>
    %46 = vector.extract_strided_slice %21 {offsets = [0, 0], sizes = [8, 32], strides = [1, 1]} : vector<32x32xbf16> to vector<8x32xbf16>
    %cst_26 = arith.constant dense<0.000000e+00> : vector<8x32xf32>
    %47 = tpu.matmul %45, %46, %cst_26 {dimension_numbers = #tpu.dot_dimension_numbers<[1], [0], [0], [1], [0, 0, 1, 1], [], []>} : vector<8x8xbf16>, vector<8x32xbf16>, vector<8x32xf32> -> vector<8x32xf32>
    %48 = arith.addf %22, %47 : vector<8x32xf32>
    %49 = vector.extract_strided_slice %18 {offsets = [0, 8], sizes = [8, 8], strides = [1, 1]} : vector<8x32xbf16> to vector<8x8xbf16>
    %50 = vector.extract_strided_slice %19 {offsets = [0, 8], sizes = [8, 8], strides = [1, 1]} : vector<8x32xbf16> to vector<8x8xbf16>
    %51 = vector.extract_strided_slice %20 {offsets = [0, 8], sizes = [8, 8], strides = [1, 1]} : vector<8x32xbf16> to vector<8x8xbf16>
    %cst_27 = arith.constant dense<0.000000e+00> : vector<8x8xf32>
    %52 = tpu.matmul %49, %50, %cst_27 {dimension_numbers = #tpu.dot_dimension_numbers<[1], [1], [0], [0], [0, 0, 1, 0], [], []>} : vector<8x8xbf16>, vector<8x8xbf16>, vector<8x8xf32> -> vector<8x8xf32>
    %cst_28 = arith.constant 0.353553385 : f32
    %53 = vector.broadcast %cst_28 : f32 to vector<8x8xf32>
    %54 = arith.mulf %52, %53 : vector<8x8xf32>
    %cst_29 = arith.constant dense<0xFF800000> : vector<8xf32>
    %55 = vector.multi_reduction <maximumf>, %54, %cst_29 [1] : vector<8x8xf32> to vector<8xf32>
    %56 = vector.shape_cast %55 : vector<8xf32> to vector<8x1xf32>
    %57 = vector.broadcast %56 : vector<8x1xf32> to vector<8x8xf32>
    %58 = arith.subf %54, %57 : vector<8x8xf32>
    %59 = math.exp %58 : vector<8x8xf32>
    %cst_30 = arith.constant dense<0.000000e+00> : vector<8xf32>
    %60 = vector.multi_reduction <add>, %59, %cst_30 [1] : vector<8x8xf32> to vector<8xf32>
    %61 = vector.shape_cast %60 : vector<8xf32> to vector<8x1xf32>
    %62 = tpu.reciprocal %61 {approx = true} : vector<8x1xf32> -> vector<8x1xf32>
    %63 = vector.broadcast %62 : vector<8x1xf32> to vector<8x8xf32>
    %64 = arith.mulf %59, %63 : vector<8x8xf32>
    %65 = arith.truncf %64 : vector<8x8xf32> to vector<8x8xbf16>
    %c0_31 = arith.constant 0 : index
    %c1 = arith.constant 1 : index
    %c0_32 = arith.constant 0 : index
    %c0_33 = arith.constant 0 : index
    %66 = vector.load %arg10[%c0_31, %c1, %c0_32, %c0_33] : memref<1x4x8x8xbf16, #tpu.memory_space<vmem>>, vector<1x1x8x8xbf16>
    %67 = vector.shape_cast %66 : vector<1x1x8x8xbf16> to vector<8x8xbf16>
    %68 = vector.shape_cast %65 : vector<8x8xbf16> to vector<1x1x8x8xbf16>
    tpu.vector_store %arg10[%c0_31, %c1, %c0_32, %c0_33], %68 {strides = array<i32>} : memref<1x4x8x8xbf16, #tpu.memory_space<vmem>>, vector<1x1x8x8xbf16>,
    %69 = arith.truncf %64 : vector<8x8xf32> to vector<8x8xbf16>
    %cst_34 = arith.constant dense<0.000000e+00> : vector<8x8xf32>
    %70 = tpu.matmul %69, %51, %cst_34 {dimension_numbers = #tpu.dot_dimension_numbers<[1], [0], [0], [1], [0, 0, 1, 1], [], []>} : vector<8x8xbf16>, vector<8x8xbf16>, vector<8x8xf32> -> vector<8x8xf32>
    %71 = arith.truncf %70 : vector<8x8xf32> to vector<8x8xbf16>
    %72 = vector.extract_strided_slice %21 {offsets = [8, 0], sizes = [8, 32], strides = [1, 1]} : vector<32x32xbf16> to vector<8x32xbf16>
    %cst_35 = arith.constant dense<0.000000e+00> : vector<8x32xf32>
    %73 = tpu.matmul %71, %72, %cst_35 {dimension_numbers = #tpu.dot_dimension_numbers<[1], [0], [0], [1], [0, 0, 1, 1], [], []>} : vector<8x8xbf16>, vector<8x32xbf16>, vector<8x32xf32> -> vector<8x32xf32>
    %74 = arith.addf %48, %73 : vector<8x32xf32>
    %75 = vector.extract_strided_slice %18 {offsets = [0, 16], sizes = [8, 8], strides = [1, 1]} : vector<8x32xbf16> to vector<8x8xbf16>
    %76 = vector.extract_strided_slice %19 {offsets = [0, 16], sizes = [8, 8], strides = [1, 1]} : vector<8x32xbf16> to vector<8x8xbf16>
    %77 = vector.extract_strided_slice %20 {offsets = [0, 16], sizes = [8, 8], strides = [1, 1]} : vector<8x32xbf16> to vector<8x8xbf16>
    %cst_36 = arith.constant dense<0.000000e+00> : vector<8x8xf32>
    %78 = tpu.matmul %75, %76, %cst_36 {dimension_numbers = #tpu.dot_dimension_numbers<[1], [1], [0], [0], [0, 0, 1, 0], [], []>} : vector<8x8xbf16>, vector<8x8xbf16>, vector<8x8xf32> -> vector<8x8xf32>
    %cst_37 = arith.constant 0.353553385 : f32
    %79 = vector.broadcast %cst_37 : f32 to vector<8x8xf32>
    %80 = arith.mulf %78, %79 : vector<8x8xf32>
    %cst_38 = arith.constant dense<0xFF800000> : vector<8xf32>
    %81 = vector.multi_reduction <maximumf>, %80, %cst_38 [1] : vector<8x8xf32> to vector<8xf32>
    %82 = vector.shape_cast %81 : vector<8xf32> to vector<8x1xf32>
    %83 = vector.broadcast %82 : vector<8x1xf32> to vector<8x8xf32>
    %84 = arith.subf %80, %83 : vector<8x8xf32>
    %85 = math.exp %84 : vector<8x8xf32>
    %cst_39 = arith.constant dense<0.000000e+00> : vector<8xf32>
    %86 = vector.multi_reduction <add>, %85, %cst_39 [1] : vector<8x8xf32> to vector<8xf32>
    %87 = vector.shape_cast %86 : vector<8xf32> to vector<8x1xf32>
    %88 = tpu.reciprocal %87 {approx = true} : vector<8x1xf32> -> vector<8x1xf32>
    %89 = vector.broadcast %88 : vector<8x1xf32> to vector<8x8xf32>
    %90 = arith.mulf %85, %89 : vector<8x8xf32>
    %91 = arith.truncf %90 : vector<8x8xf32> to vector<8x8xbf16>
    %c0_40 = arith.constant 0 : index
    %c2 = arith.constant 2 : index
    %c0_41 = arith.constant 0 : index
    %c0_42 = arith.constant 0 : index
    %92 = vector.load %arg10[%c0_40, %c2, %c0_41, %c0_42] : memref<1x4x8x8xbf16, #tpu.memory_space<vmem>>, vector<1x1x8x8xbf16>
    %93 = vector.shape_cast %92 : vector<1x1x8x8xbf16> to vector<8x8xbf16>
    %94 = vector.shape_cast %91 : vector<8x8xbf16> to vector<1x1x8x8xbf16>
    tpu.vector_store %arg10[%c0_40, %c2, %c0_41, %c0_42], %94 {strides = array<i32>} : memref<1x4x8x8xbf16, #tpu.memory_space<vmem>>, vector<1x1x8x8xbf16>,
    %95 = arith.truncf %90 : vector<8x8xf32> to vector<8x8xbf16>
    %cst_43 = arith.constant dense<0.000000e+00> : vector<8x8xf32>
    %96 = tpu.matmul %95, %77, %cst_43 {dimension_numbers = #tpu.dot_dimension_numbers<[1], [0], [0], [1], [0, 0, 1, 1], [], []>} : vector<8x8xbf16>, vector<8x8xbf16>, vector<8x8xf32> -> vector<8x8xf32>
    %97 = arith.truncf %96 : vector<8x8xf32> to vector<8x8xbf16>
    %98 = vector.extract_strided_slice %21 {offsets = [16, 0], sizes = [8, 32], strides = [1, 1]} : vector<32x32xbf16> to vector<8x32xbf16>
    %cst_44 = arith.constant dense<0.000000e+00> : vector<8x32xf32>
    %99 = tpu.matmul %97, %98, %cst_44 {dimension_numbers = #tpu.dot_dimension_numbers<[1], [0], [0], [1], [0, 0, 1, 1], [], []>} : vector<8x8xbf16>, vector<8x32xbf16>, vector<8x32xf32> -> vector<8x32xf32>
    %100 = arith.addf %74, %99 : vector<8x32xf32>
    %101 = vector.extract_strided_slice %18 {offsets = [0, 24], sizes = [8, 8], strides = [1, 1]} : vector<8x32xbf16> to vector<8x8xbf16>
    %102 = vector.extract_strided_slice %19 {offsets = [0, 24], sizes = [8, 8], strides = [1, 1]} : vector<8x32xbf16> to vector<8x8xbf16>
    %103 = vector.extract_strided_slice %20 {offsets = [0, 24], sizes = [8, 8], strides = [1, 1]} : vector<8x32xbf16> to vector<8x8xbf16>
    %cst_45 = arith.constant dense<0.000000e+00> : vector<8x8xf32>
    %104 = tpu.matmul %101, %102, %cst_45 {dimension_numbers = #tpu.dot_dimension_numbers<[1], [1], [0], [0], [0, 0, 1, 0], [], []>} : vector<8x8xbf16>, vector<8x8xbf16>, vector<8x8xf32> -> vector<8x8xf32>
    %cst_46 = arith.constant 0.353553385 : f32
    %105 = vector.broadcast %cst_46 : f32 to vector<8x8xf32>
    %106 = arith.mulf %104, %105 : vector<8x8xf32>
    %cst_47 = arith.constant dense<0xFF800000> : vector<8xf32>
    %107 = vector.multi_reduction <maximumf>, %106, %cst_47 [1] : vector<8x8xf32> to vector<8xf32>
    %108 = vector.shape_cast %107 : vector<8xf32> to vector<8x1xf32>
    %109 = vector.broadcast %108 : vector<8x1xf32> to vector<8x8xf32>
    %110 = arith.subf %106, %109 : vector<8x8xf32>
    %111 = math.exp %110 : vector<8x8xf32>
    %cst_48 = arith.constant dense<0.000000e+00> : vector<8xf32>
    %112 = vector.multi_reduction <add>, %111, %cst_48 [1] : vector<8x8xf32> to vector<8xf32>
    %113 = vector.shape_cast %112 : vector<8xf32> to vector<8x1xf32>
    %114 = tpu.reciprocal %113 {approx = true} : vector<8x1xf32> -> vector<8x1xf32>
    %115 = vector.broadcast %114 : vector<8x1xf32> to vector<8x8xf32>
    %116 = arith.mulf %111, %115 : vector<8x8xf32>
    %117 = arith.truncf %116 : vector<8x8xf32> to vector<8x8xbf16>
    %c0_49 = arith.constant 0 : index
    %c3 = arith.constant 3 : index
    %c0_50 = arith.constant 0 : index
    %c0_51 = arith.constant 0 : index
    %118 = vector.load %arg10[%c0_49, %c3, %c0_50, %c0_51] : memref<1x4x8x8xbf16, #tpu.memory_space<vmem>>, vector<1x1x8x8xbf16>
    %119 = vector.shape_cast %118 : vector<1x1x8x8xbf16> to vector<8x8xbf16>
    %120 = vector.shape_cast %117 : vector<8x8xbf16> to vector<1x1x8x8xbf16>
    tpu.vector_store %arg10[%c0_49, %c3, %c0_50, %c0_51], %120 {strides = array<i32>} : memref<1x4x8x8xbf16, #tpu.memory_space<vmem>>, vector<1x1x8x8xbf16>,
    %121 = arith.truncf %116 : vector<8x8xf32> to vector<8x8xbf16>
    %cst_52 = arith.constant dense<0.000000e+00> : vector<8x8xf32>
    %122 = tpu.matmul %121, %103, %cst_52 {dimension_numbers = #tpu.dot_dimension_numbers<[1], [0], [0], [1], [0, 0, 1, 1], [], []>} : vector<8x8xbf16>, vector<8x8xbf16>, vector<8x8xf32> -> vector<8x8xf32>
    %123 = arith.truncf %122 : vector<8x8xf32> to vector<8x8xbf16>
    %124 = vector.extract_strided_slice %21 {offsets = [24, 0], sizes = [8, 32], strides = [1, 1]} : vector<32x32xbf16> to vector<8x32xbf16>
    %cst_53 = arith.constant dense<0.000000e+00> : vector<8x32xf32>
    %125 = tpu.matmul %123, %124, %cst_53 {dimension_numbers = #tpu.dot_dimension_numbers<[1], [0], [0], [1], [0, 0, 1, 1], [], []>} : vector<8x8xbf16>, vector<8x32xbf16>, vector<8x32xf32> -> vector<8x32xf32>
    %126 = arith.addf %100, %125 : vector<8x32xf32>
    %c0_54 = arith.constant 0 : index
    %c0_55 = arith.constant 0 : index
    %127 = vector.load %arg8[%c0_54, %c0_55] : memref<1x32xbf16, #tpu.memory_space<vmem>>, vector<1x32xbf16>
    %128 = arith.extf %127 : vector<1x32xbf16> to vector<1x32xf32>
    %129 = vector.broadcast %128 : vector<1x32xf32> to vector<8x32xf32>
    %130 = arith.addf %126, %129 : vector<8x32xf32>
    %131 = arith.truncf %130 : vector<8x32xf32> to vector<8x32xbf16>
    %c0_56 = arith.constant 0 : index
    %c0_57 = arith.constant 0 : index
    %c0_58 = arith.constant 0 : index
    %132 = vector.load %arg9[%c0_56, %c0_57, %c0_58] : memref<1x8x32xbf16, #tpu.memory_space<vmem>>, vector<1x8x32xbf16>
    %133 = vector.shape_cast %132 : vector<1x8x32xbf16> to vector<8x32xbf16>
    %134 = vector.shape_cast %131 : vector<8x32xbf16> to vector<1x8x32xbf16>
    tpu.vector_store %arg9[%c0_56, %c0_57, %c0_58], %134 {strides = array<i32>} : memref<1x8x32xbf16, #tpu.memory_space<vmem>>, vector<1x8x32xbf16>,
    return
  }
  func.func @transform_0(%arg0: i32) -> (i32, i32, i32) {
    %c0_i32 = arith.constant 0 : i32
    %c0_i32_0 = arith.constant 0 : i32
    %c0_i32_1 = arith.constant 0 : i32
    return %arg0, %c0_i32, %c0_i32_0 : i32, i32, i32
  }
  func.func @transform_1(%arg0: i32) -> (i32, i32, i32) {
    %c0_i32 = arith.constant 0 : i32
    %c0_i32_0 = arith.constant 0 : i32
    %c0_i32_1 = arith.constant 0 : i32
    return %arg0, %c0_i32, %c0_i32_0 : i32, i32, i32
  }
  func.func @transform_2(%arg0: i32) -> (i32, i32) {
    %c0_i32 = arith.constant 0 : i32
    %c0_i32_0 = arith.constant 0 : i32
    %c0_i32_1 = arith.constant 0 : i32
    return %c0_i32, %c0_i32_0 : i32, i32
  }
  func.func @transform_3(%arg0: i32) -> (i32, i32) {
    %c0_i32 = arith.constant 0 : i32
    %c0_i32_0 = arith.constant 0 : i32
    %c0_i32_1 = arith.constant 0 : i32
    return %c0_i32, %c0_i32_0 : i32, i32
  }
  func.func @transform_4(%arg0: i32) -> (i32, i32) {
    %c0_i32 = arith.constant 0 : i32
    %c0_i32_0 = arith.constant 0 : i32
    %c0_i32_1 = arith.constant 0 : i32
    return %c0_i32, %c0_i32_0 : i32, i32
  }
  func.func @transform_5(%arg0: i32) -> (i32, i32) {
    %c0_i32 = arith.constant 0 : i32
    %c0_i32_0 = arith.constant 0 : i32
    %c0_i32_1 = arith.constant 0 : i32
    return %c0_i32, %c0_i32_0 : i32, i32
  }
  func.func @transform_6(%arg0: i32) -> (i32, i32) {
    %c0_i32 = arith.constant 0 : i32
    %c0_i32_0 = arith.constant 0 : i32
    %c0_i32_1 = arith.constant 0 : i32
    return %c0_i32, %c0_i32_0 : i32, i32
  }
  func.func @transform_7(%arg0: i32) -> (i32, i32) {
    %c0_i32 = arith.constant 0 : i32
    %c0_i32_0 = arith.constant 0 : i32
    %c0_i32_1 = arith.constant 0 : i32
    return %c0_i32, %c0_i32_0 : i32, i32
  }
  func.func @transform_8(%arg0: i32) -> (i32, i32, i32) {
    %c0_i32 = arith.constant 0 : i32
    %c0_i32_0 = arith.constant 0 : i32
    %c0_i32_1 = arith.constant 0 : i32
    return %arg0, %c0_i32, %c0_i32_0 : i32, i32, i32
  }
  func.func @transform_9(%arg0: i32) -> (i32, i32, i32, i32) {
    %c0_i32 = arith.constant 0 : i32
    %c0_i32_0 = arith.constant 0 : i32
    %c0_i32_1 = arith.constant 0 : i32
    %c0_i32_2 = arith.constant 0 : i32
    return %arg0, %c0_i32, %c0_i32_0, %c0_i32_1 : i32, i32, i32, i32
  }
}

</mosaic_0001>

<llo_original>
// kernel: tpu_custom_call.1
$region0: #{tpu_custom_call.1}
  #allocation0 [shape = 'u32[]', space=smem, size = 0x4, offset = 0x4, fixed_abs, tag = 'smem constant byte address 0x4 - core index']
  #allocation1 [shape = 'u32[144,128]{1,0:T(1,128)}', space=vmem, size = 0x12000, scoped, tag = 'internal scratch']
  %s0 = inlined_call_operand.hbm [shape: bf16[2,8,32], index: 0, kind: input, shape index: {}]
  %s1 = inlined_call_operand.hbm [shape: bf16[2,8,32], index: 1, kind: input, shape index: {}]
  %s2 = inlined_call_operand.hbm [shape: bf16[32,32], index: 2, kind: input, shape index: {}]
  %s3 = inlined_call_operand.vmem [shape: bf16[1,32], index: 3, kind: input, shape index: {}]
  %s4 = inlined_call_operand.hbm [shape: bf16[32,64], index: 4, kind: input, shape index: {}]
  %s5 = inlined_call_operand.vmem [shape: bf16[1,64], index: 5, kind: input, shape index: {}]
  %s6 = inlined_call_operand.vmem [shape: bf16[32,32], index: 6, kind: input, shape index: {}]
  %s7 = inlined_call_operand.vmem [shape: bf16[1,32], index: 7, kind: input, shape index: {}]
  %s8 = inlined_call_operand.hbm [shape: bf16[2,8,32], index: 8, kind: output, shape index: {0}]
  %s9 = inlined_call_operand.hbm [shape: bf16[2,4,8,8], index: 9, kind: output, shape index: {1}]
  %10 = xla_tuple %s8, %s9
  %s11 = sld [smem:[#allocation0]]
  $region89: #{tpu_custom_call.1} parent=0
    _
  %s13 = ssub.s32 1, %s11
  %s14 = scalar_select 0, %s13, %s11
  $region1: #{tpu_custom_call.1} parent=0
    #allocation2 [shape = 'u8[4096]{0}', space=vmem, size = 0x1000, scoped, tag = 'input window, operand 0']
    #allocation3 [shape = 's32[2]{0}', space=sflag, size = 0x8, scoped, tag = 'scoped memory for tpu_custom_call.1']
    #allocation4 [shape = 's32[2]{0}', space=sflag, size = 0x8, scoped, tag = 'scoped memory for tpu_custom_call.1']
    #allocation5 [shape = 'u8[4096]{0}', space=vmem, size = 0x1000, scoped, tag = 'input window, operand 1']
    #allocation6 [shape = 's32[2]{0}', space=sflag, size = 0x8, scoped, tag = 'scoped memory for tpu_custom_call.1']
    #allocation7 [shape = 'u8[8192]{0}', space=vmem, size = 0x2000, scoped, tag = 'input window, operand 2, single buffered']
    #allocation8 [shape = 'u8[8192]{0}', space=vmem, size = 0x2000, scoped, tag = 'input window, operand 4, single buffered']
    #allocation9 [shape = 's32[1]{0}', space=sflag, size = 0x4, scoped, tag = 'scoped memory for tpu_custom_call.1']
    #allocation10 [shape = 'u8[4096]{0}', space=vmem, size = 0x1000, scoped, tag = 'output window, operand 0']
    #allocation11 [shape = 'u8[16384]{0}', space=vmem, size = 0x4000, scoped, tag = 'output window, operand 1']
    #allocation12 [shape = 's32[2]{0}', space=sflag, size = 0x8, scoped, tag = 'scoped memory for tpu_custom_call.1']
    %15 = vsyncpa [#allocation3], 0
    %s16 = scalar_lea.sflag [#allocation3], 1
    %17 = vsyncpa %s16, 0
    %18 = vsyncpa [#allocation6], 0
    %s19 = scalar_lea.sflag [#allocation6], 1
    %20 = vsyncpa %s19, 0
    %21 = vsyncpa [#allocation9], 0
    %22 = vsyncpa [#allocation4], 0
    %s23 = scalar_lea.sflag [#allocation4], 1
    %24 = vsyncpa %s23, 0
    %25 = vsyncpa [#allocation12], 0
    %s26 = scalar_lea.sflag [#allocation12], 1
    %27 = vsyncpa %s26, 0
    loop: start=0, step=1, limit=4
    $region2: #{tpu_custom_call.1} parent=1 // loop_pre_header
      _
    $region3: #{tpu_custom_call.1} parent=1 // loop_header
      %s29 = sphi 0, %s33
      %p30 = scmp.ge.s32.totalorder %s29, 4
      %s39 = sphi 0, %s41
      %s42 = sphi 0, %s39
      %s43 = sphi 0, %s42
      %s59 = sphi 0, %s43
      %s65 = sphi 0, %s67
      %s68 = sphi 0, %s65
      %s69 = sphi 0, %s68
      %s85 = sphi 0, %s69
      %s89 = sphi 0, %s89
      %s91 = sphi 0, %s89
      %s92 = sphi 0, %s91
      %s106 = sphi 0, %s92
      %s110 = sphi 0, %s110
      %s112 = sphi 0, %s110
      %s113 = sphi 0, %s112
      %s127 = sphi 0, %s113
      %s131 = sphi 0, %s131
      %s133 = sphi 0, %s131
      %s134 = sphi 0, %s133
      %s148 = sphi 0, %s134
      %s152 = sphi 0, %s152
      %s154 = sphi 0, %s152
      %s155 = sphi 0, %s154
      %s169 = sphi 0, %s155
      %s173 = sphi 0, %s173
      %s175 = sphi 0, %s173
      %s176 = sphi 0, %s175
      %s190 = sphi 0, %s176
      %s194 = sphi 0, %s194
      %s196 = sphi 0, %s194
      %s197 = sphi 0, %s196
      %s211 = sphi 0, %s197
      %s217 = sphi 0, %s219
      %s220 = sphi 0, %s217
      %s221 = sphi 0, %s220
      %s237 = sphi 0, %s221
      %s243 = sphi 0, %s245
      %s246 = sphi 0, %s243
      %s247 = sphi 0, %s246
      %s263 = sphi 0, %s247
    $region4: #{tpu_custom_call.1} parent=1 // loop_header_branch
      %32 = sbr.rel (%p30) target = $region8
    $region5: #{tpu_custom_call.1} parent=1 // loop_body
      %s34 = ssub.s32 %s29, 1
      %s35 = ssub.s32 %s29, 2
      %s36 = sadd.s32 %s29, 1
      %s37 = ssub.s32 %s29, %s36
      %p38 = scmp.eq.s32.totalorder %s37, 0
      %s40 = sadd.s32 %s39, 1
      %s41 = scalar_select %p38, %s39, %s40
      %p44 = pneg %p38
      %p45 = scmp.eq.s32.totalorder %s29, 1
      %p46 = por %p44, %p45
      %p47 = scmp.ne.s32.totalorder %s39, %s42
      %p48 = scmp.eq.s32.totalorder %s29, 0
      %p49 = por %p47, %p48
      %p50 = scmp.ne.s32.totalorder %s39, %s42
      %p51 = scmp.eq.s32.totalorder %s34, 1
      %p52 = por %p50, %p51
      %p53 = scmp.ne.s32.totalorder %s42, %s43
      %p54 = scmp.eq.s32.totalorder %s34, 0
      %p55 = por %p53, %p54
      %p56 = scmp.ne.s32.totalorder %s42, %s43
      %p57 = scmp.eq.s32.totalorder %s35, 1
      %p58 = por %p56, %p57
      %p60 = scmp.ne.s32.totalorder %s43, %s59
      %p61 = scmp.eq.s32.totalorder %s35, 0
      %p62 = por %p60, %p61
      %s63 = ssub.s32 %s29, %s36
      %p64 = scmp.eq.s32.totalorder %s63, 0
      %s66 = sadd.s32 %s65, 1
      %s67 = scalar_select %p64, %s65, %s66
      %p70 = pneg %p64
      %p71 = scmp.eq.s32.totalorder %s29, 1
      %p72 = por %p70, %p71
      %p73 = scmp.ne.s32.totalorder %s65, %s68
      %p74 = scmp.eq.s32.totalorder %s29, 0
      %p75 = por %p73, %p74
      %p76 = scmp.ne.s32.totalorder %s65, %s68
      %p77 = scmp.eq.s32.totalorder %s34, 1
      %p78 = por %p76, %p77
      %p79 = scmp.ne.s32.totalorder %s68, %s69
      %p80 = scmp.eq.s32.totalorder %s34, 0
      %p81 = por %p79, %p80
      %p82 = scmp.ne.s32.totalorder %s68, %s69
      %p83 = scmp.eq.s32.totalorder %s35, 1
      %p84 = por %p82, %p83
      %p86 = scmp.ne.s32.totalorder %s69, %s85
      %p87 = scmp.eq.s32.totalorder %s35, 0
      %p88 = por %p86, %p87
      %s90 = sadd.s32 %s89, 1
      %p93 = scmp.eq.s32.totalorder %s29, 1
      %p94 = scmp.ne.s32.totalorder %s89, %s91
      %p95 = scmp.eq.s32.totalorder %s29, 0
      %p96 = por %p94, %p95
      %p97 = scmp.ne.s32.totalorder %s89, %s91
      %p98 = scmp.eq.s32.totalorder %s34, 1
      %p99 = por %p97, %p98
      %p100 = scmp.ne.s32.totalorder %s91, %s92
      %p101 = scmp.eq.s32.totalorder %s34, 0
      %p102 = por %p100, %p101
      %p103 = scmp.ne.s32.totalorder %s91, %s92
      %p104 = scmp.eq.s32.totalorder %s35, 1
      %p105 = por %p103, %p104
      %p107 = scmp.ne.s32.totalorder %s92, %s106
      %p108 = scmp.eq.s32.totalorder %s35, 0
      %p109 = por %p107, %p108
      %s111 = sadd.s32 %s110, 1
      %p114 = scmp.eq.s32.totalorder %s29, 1
      %p115 = scmp.ne.s32.totalorder %s110, %s112
      %p116 = scmp.eq.s32.totalorder %s29, 0
      %p117 = por %p115, %p116
      %p118 = scmp.ne.s32.totalorder %s110, %s112
      %p119 = scmp.eq.s32.totalorder %s34, 1
      %p120 = por %p118, %p119
      %p121 = scmp.ne.s32.totalorder %s112, %s113
      %p122 = scmp.eq.s32.totalorder %s34, 0
      %p123 = por %p121, %p122
      %p124 = scmp.ne.s32.totalorder %s112, %s113
      %p125 = scmp.eq.s32.totalorder %s35, 1
      %p126 = por %p124, %p125
      %p128 = scmp.ne.s32.totalorder %s113, %s127
      %p129 = scmp.eq.s32.totalorder %s35, 0
      %p130 = por %p128, %p129
      %s132 = sadd.s32 %s131, 1
      %p135 = scmp.eq.s32.totalorder %s29, 1
      %p136 = scmp.ne.s32.totalorder %s131, %s133
      %p137 = scmp.eq.s32.totalorder %s29, 0
      %p138 = por %p136, %p137
      %p139 = scmp.ne.s32.totalorder %s131, %s133
      %p140 = scmp.eq.s32.totalorder %s34, 1
      %p141 = por %p139, %p140
      %p142 = scmp.ne.s32.totalorder %s133, %s134
      %p143 = scmp.eq.s32.totalorder %s34, 0
      %p144 = por %p142, %p143
      %p145 = scmp.ne.s32.totalorder %s133, %s134
      %p146 = scmp.eq.s32.totalorder %s35, 1
      %p147 = por %p145, %p146
      %p149 = scmp.ne.s32.totalorder %s134, %s148
      %p150 = scmp.eq.s32.totalorder %s35, 0
      %p151 = por %p149, %p150
      %s153 = sadd.s32 %s152, 1
      %p156 = scmp.eq.s32.totalorder %s29, 1
      %p157 = scmp.ne.s32.totalorder %s152, %s154
      %p158 = scmp.eq.s32.totalorder %s29, 0
      %p159 = por %p157, %p158
      %p160 = scmp.ne.s32.totalorder %s152, %s154
      %p161 = scmp.eq.s32.totalorder %s34, 1
      %p162 = por %p160, %p161
      %p163 = scmp.ne.s32.totalorder %s154, %s155
      %p164 = scmp.eq.s32.totalorder %s34, 0
      %p165 = por %p163, %p164
      %p166 = scmp.ne.s32.totalorder %s154, %s155
      %p167 = scmp.eq.s32.totalorder %s35, 1
      %p168 = por %p166, %p167
      %p170 = scmp.ne.s32.totalorder %s155, %s169
      %p171 = scmp.eq.s32.totalorder %s35, 0
      %p172 = por %p170, %p171
      %s174 = sadd.s32 %s173, 1
      %p177 = scmp.eq.s32.totalorder %s29, 1
      %p178 = scmp.ne.s32.totalorder %s173, %s175
      %p179 = scmp.eq.s32.totalorder %s29, 0
      %p180 = por %p178, %p179
      %p181 = scmp.ne.s32.totalorder %s173, %s175
      %p182 = scmp.eq.s32.totalorder %s34, 1
      %p183 = por %p181, %p182
      %p184 = scmp.ne.s32.totalorder %s175, %s176
      %p185 = scmp.eq.s32.totalorder %s34, 0
      %p186 = por %p184, %p185
      %p187 = scmp.ne.s32.totalorder %s175, %s176
      %p188 = scmp.eq.s32.totalorder %s35, 1
      %p189 = por %p187, %p188
      %p191 = scmp.ne.s32.totalorder %s176, %s190
      %p192 = scmp.eq.s32.totalorder %s35, 0
      %p193 = por %p191, %p192
      %s195 = sadd.s32 %s194, 1
      %p198 = scmp.eq.s32.totalorder %s29, 1
      %p199 = scmp.ne.s32.totalorder %s194, %s196
      %p200 = scmp.eq.s32.totalorder %s29, 0
      %p201 = por %p199, %p200
      %p202 = scmp.ne.s32.totalorder %s194, %s196
      %p203 = scmp.eq.s32.totalorder %s34, 1
      %p204 = por %p202, %p203
      %p205 = scmp.ne.s32.totalorder %s196, %s197
      %p206 = scmp.eq.s32.totalorder %s34, 0
      %p207 = por %p205, %p206
      %p208 = scmp.ne.s32.totalorder %s196, %s197
      %p209 = scmp.eq.s32.totalorder %s35, 1
      %p210 = por %p208, %p209
      %p212 = scmp.ne.s32.totalorder %s197, %s211
      %p213 = scmp.eq.s32.totalorder %s35, 0
      %p214 = por %p212, %p213
      %s215 = ssub.s32 %s29, %s36
      %p216 = scmp.eq.s32.totalorder %s215, 0
      %s218 = sadd.s32 %s217, 1
      %s219 = scalar_select %p216, %s217, %s218
      %p222 = pneg %p216
      %p223 = scmp.eq.s32.totalorder %s29, 1
      %p224 = por %p222, %p223
      %p225 = scmp.ne.s32.totalorder %s217, %s220
      %p226 = scmp.eq.s32.totalorder %s29, 0
      %p227 = por %p225, %p226
      %p228 = scmp.ne.s32.totalorder %s217, %s220
      %p229 = scmp.eq.s32.totalorder %s34, 1
      %p230 = por %p228, %p229
      %p231 = scmp.ne.s32.totalorder %s220, %s221
      %p232 = scmp.eq.s32.totalorder %s34, 0
      %p233 = por %p231, %p232
      %p234 = scmp.ne.s32.totalorder %s220, %s221
      %p235 = scmp.eq.s32.totalorder %s35, 1
      %p236 = por %p234, %p235
      %p238 = scmp.ne.s32.totalorder %s221, %s237
      %p239 = scmp.eq.s32.totalorder %s35, 0
      %p240 = por %p238, %p239
      %s241 = ssub.s32 %s29, %s36
      %p242 = scmp.eq.s32.totalorder %s241, 0
      %s244 = sadd.s32 %s243, 1
      %s245 = scalar_select %p242, %s243, %s244
      %p248 = pneg %p242
      %p249 = scmp.eq.s32.totalorder %s29, 1
      %p250 = por %p248, %p249
      %p251 = scmp.ne.s32.totalorder %s243, %s246
      %p252 = scmp.eq.s32.totalorder %s29, 0
      %p253 = por %p251, %p252
      %p254 = scmp.ne.s32.totalorder %s243, %s246
      %p255 = scmp.eq.s32.totalorder %s34, 1
      %p256 = por %p254, %p255
      %p257 = scmp.ne.s32.totalorder %s246, %s247
      %p258 = scmp.eq.s32.totalorder %s34, 0
      %p259 = por %p257, %p258
      %p260 = scmp.ne.s32.totalorder %s246, %s247
      %p261 = scmp.eq.s32.totalorder %s35, 1
      %p262 = por %p260, %p261
      %p264 = scmp.ne.s32.totalorder %s247, %s263
      %p265 = scmp.eq.s32.totalorder %s35, 0
      %p266 = por %p264, %p265
      %p267 = scmp.le.s32.totalorder 1, %s29
      %p268 = scmp.lt.s32.totalorder %s29, 3
      %p269 = pnand %p267, %p268
      %p270 = pneg %p269
      // Predicated region
      $region9: #{tpu_custom_call.1} parent=5 // pred_check
        _
      $region10: #{tpu_custom_call.1} parent=5 // pred_check_branch
        %272 = sbr.rel (%p269) target = $region12
      $region11: #{tpu_custom_call.1} parent=5 // pred_region
        %s273 = ssub.s32 %s29, 1
        // Predicated region
        $region13: #{tpu_custom_call.1} parent=11 // pred_check
          %p274 = pneg %p102
        $region14: #{tpu_custom_call.1} parent=11 // pred_check_branch
          %276 = sbr.rel (%p274) target = $region16
        $region15: #{tpu_custom_call.1} parent=11 // pred_region
          %s278 = ssub.s32 256, 256
          %279 = vsyncadd [#allocation6], %s278
          %s280 = sshll.u32 [#allocation7], 4
          %s281 = int_to_ptr.vmem [resolvable:$true] %s280
          %286 = dma.hbm_to_vmem [thread:$0]  %s2, 256, %s281, [#allocation6], 64, 64, 4
        $region16: #{tpu_custom_call.1} parent=11 // pred_fallthru
          _
        // Predicated region
        $region17: #{tpu_custom_call.1} parent=11 // pred_check
          %p287 = pneg %p123
        $region18: #{tpu_custom_call.1} parent=11 // pred_check_branch
          %289 = sbr.rel (%p287) target = $region20
        $region19: #{tpu_custom_call.1} parent=11 // pred_region
          _
        $region20: #{tpu_custom_call.1} parent=11 // pred_fallthru
          _
        // Predicated region
        $region21: #{tpu_custom_call.1} parent=11 // pred_check
          %p290 = pneg %p144
        $region22: #{tpu_custom_call.1} parent=11 // pred_check_branch
          %292 = sbr.rel (%p290) target = $region24
        $region23: #{tpu_custom_call.1} parent=11 // pred_region
          %s294 = ssub.s32 256, 256
          %295 = vsyncadd [#allocation9], %s294
          %s296 = sshll.u32 [#allocation8], 4
          %s297 = int_to_ptr.vmem [resolvable:$true] %s296
          %302 = dma.hbm_to_vmem [thread:$0]  %s4, 256, %s297, [#allocation9], 64, 64, 4
        $region24: #{tpu_custom_call.1} parent=11 // pred_fallthru
          _
        // Predicated region
        $region25: #{tpu_custom_call.1} parent=11 // pred_check
          %p303 = pneg %p165
        $region26: #{tpu_custom_call.1} parent=11 // pred_check_branch
          %305 = sbr.rel (%p303) target = $region28
        $region27: #{tpu_custom_call.1} parent=11 // pred_region
          _
        $region28: #{tpu_custom_call.1} parent=11 // pred_fallthru
          _
        // Predicated region
        $region29: #{tpu_custom_call.1} parent=11 // pred_check
          %p306 = pneg %p186
        $region30: #{tpu_custom_call.1} parent=11 // pred_check_branch
          %308 = sbr.rel (%p306) target = $region32
        $region31: #{tpu_custom_call.1} parent=11 // pred_region
          _
        $region32: #{tpu_custom_call.1} parent=11 // pred_fallthru
          _
        // Predicated region
        $region33: #{tpu_custom_call.1} parent=11 // pred_check
          %p309 = pneg %p207
        $region34: #{tpu_custom_call.1} parent=11 // pred_check_branch
          %311 = sbr.rel (%p309) target = $region36
        $region35: #{tpu_custom_call.1} parent=11 // pred_region
          _
        $region36: #{tpu_custom_call.1} parent=11 // pred_fallthru
          _
      $region12: #{tpu_custom_call.1} parent=5 // pred_fallthru
        _
      %p312 = scmp.lt.s32.totalorder %s29, 2
      // Predicated region
      $region37: #{tpu_custom_call.1} parent=5 // pred_check
        %p313 = pneg %p312
      $region38: #{tpu_custom_call.1} parent=5 // pred_check_branch
        %315 = sbr.rel (%p313) target = $region40
      $region39: #{tpu_custom_call.1} parent=5 // pred_region
        // Predicated region
        $region41: #{tpu_custom_call.1} parent=39 // pred_check
          %p316 = pneg %p49
        $region42: #{tpu_custom_call.1} parent=39 // pred_check_branch
          %318 = sbr.rel (%p316) target = $region44
        $region43: #{tpu_custom_call.1} parent=39 // pred_region
          %s319 = sand.u32 %s39, 1
          %s320 = scalar_lea.sflag [#allocation3], %s319
          %s321 = sand.u32 %s39, 1
          %s322 = smul.addr %s321, 4
          %s323 = scalar_lea.vmem [#allocation2], %s322
          %s325 = ssub.s32 64, 64
          %326 = vsyncadd %s320, %s325
          %s327 = smul.addr %s29, 64
          %s328 = scalar_lea.hbm %s0, %s327
          %s330 = sshll.u32 %s323, 4
          %s331 = int_to_ptr.vmem [resolvable:$true] %s330
          %333 = dma.hbm_to_vmem [thread:$0]  %s328, 64, %s331, %s320
        $region44: #{tpu_custom_call.1} parent=39 // pred_fallthru
          _
        // Predicated region
        $region45: #{tpu_custom_call.1} parent=39 // pred_check
          %p334 = pneg %p75
        $region46: #{tpu_custom_call.1} parent=39 // pred_check_branch
          %336 = sbr.rel (%p334) target = $region48
        $region47: #{tpu_custom_call.1} parent=39 // pred_region
          %s337 = sand.u32 %s29, 1
          %s338 = scalar_lea.sflag [#allocation6], %s337
          %s339 = sand.u32 %s65, 1
          %s340 = smul.addr %s339, 4
          %s341 = scalar_lea.vmem [#allocation5], %s340
          %s343 = ssub.s32 64, 64
          %344 = vsyncadd %s338, %s343
          %s345 = smul.addr %s29, 64
          %s346 = scalar_lea.hbm %s1, %s345
          %s348 = sshll.u32 %s341, 4
          %s349 = int_to_ptr.vmem [resolvable:$true] %s348
          %351 = dma.hbm_to_vmem [thread:$0]  %s346, 64, %s349, %s338
        $region48: #{tpu_custom_call.1} parent=39 // pred_fallthru
          _
      $region40: #{tpu_custom_call.1} parent=5 // pred_fallthru
        _
      %p352 = scmp.le.s32.totalorder 1, %s29
      %p353 = scmp.lt.s32.totalorder %s29, 3
      %p354 = pnand %p352, %p353
      %p355 = pneg %p354
      // Predicated region
      $region49: #{tpu_custom_call.1} parent=5 // pred_check
        _
      $region50: #{tpu_custom_call.1} parent=5 // pred_check_branch
        %357 = sbr.rel (%p354) target = $region52
      $region51: #{tpu_custom_call.1} parent=5 // pred_region
        %s358 = ssub.s32 %s29, 1
        %s359 = sand.u32 %s42, 1
        %s360 = scalar_lea.sflag [#allocation3], %s359
        %s361 = sand.u32 %s42, 1
        %s362 = smul.addr %s361, 4
        %s363 = scalar_lea.vmem [#allocation2], %s362
        // Predicated region
        $region53: #{tpu_custom_call.1} parent=51 // pred_check
          %p364 = pneg %p55
        $region54: #{tpu_custom_call.1} parent=51 // pred_check_branch
          %366 = sbr.rel (%p364) target = $region56
        $region55: #{tpu_custom_call.1} parent=51 // pred_region
          %367 = dma.done %s360, 64
        $region56: #{tpu_custom_call.1} parent=51 // pred_fallthru
          _
        %s368 = sand.u32 %s34, 1
        %s369 = scalar_lea.sflag [#allocation6], %s368
        %s370 = sand.u32 %s68, 1
        %s371 = smul.addr %s370, 4
        %s372 = scalar_lea.vmem [#allocation5], %s371
        // Predicated region
        $region57: #{tpu_custom_call.1} parent=51 // pred_check
          %p373 = pneg %p81
        $region58: #{tpu_custom_call.1} parent=51 // pred_check_branch
          %375 = sbr.rel (%p373) target = $region60
        $region59: #{tpu_custom_call.1} parent=51 // pred_region
          %376 = dma.done %s369, 64
        $region60: #{tpu_custom_call.1} parent=51 // pred_fallthru
          _
        // Predicated region
        $region61: #{tpu_custom_call.1} parent=51 // pred_check
          %p377 = pneg %p102
        $region62: #{tpu_custom_call.1} parent=51 // pred_check_branch
          %379 = sbr.rel (%p377) target = $region64
        $region63: #{tpu_custom_call.1} parent=51 // pred_region
          %380 = dma.done [#allocation6], 256
        $region64: #{tpu_custom_call.1} parent=51 // pred_fallthru
          _
        // Predicated region
        $region65: #{tpu_custom_call.1} parent=51 // pred_check
          %p381 = pneg %p144
        $region66: #{tpu_custom_call.1} parent=51 // pred_check_branch
          %383 = sbr.rel (%p381) target = $region68
        $region67: #{tpu_custom_call.1} parent=51 // pred_region
          %384 = dma.done [#allocation9], 256
        $region68: #{tpu_custom_call.1} parent=51 // pred_fallthru
          _
        %s385 = sand.u32 %s42, 1
        %s386 = scalar_lea.sflag [#allocation3], %s385
        %s387 = sand.u32 %s42, 1
        %s388 = smul.addr %s387, 4
        %s389 = scalar_lea.vmem [#allocation2], %s388
        %p390 = pneg %p55
        %p391 = pneg %p52
        %s392 = sand.u32 %s34, 1
        %s393 = scalar_lea.sflag [#allocation6], %s392
        %s394 = sand.u32 %s68, 1
        %s395 = smul.addr %s394, 4
        %s396 = scalar_lea.vmem [#allocation5], %s395
        %p397 = pneg %p81
        %p398 = pneg %p78
        %p399 = pneg %p102
        %p400 = pneg %p99
        %p401 = pneg %p123
        %p402 = pneg %p120
        %p403 = pneg %p144
        %p404 = pneg %p141
        %p405 = pneg %p165
        %p406 = pneg %p162
        %p407 = pneg %p186
        %p408 = pneg %p183
        %p409 = pneg %p207
        %p410 = pneg %p204
        %p411 = pneg %p233
        %p412 = pneg %p230
        %s413 = sand.u32 %s220, 1
        %s414 = scalar_lea.sflag [#allocation4], %s413
        %s415 = sand.u32 %s220, 1
        %s416 = smul.addr %s415, 4
        %s417 = scalar_lea.vmem [#allocation10], %s416
        %p418 = pneg %p259
        %p419 = pneg %p256
        %s420 = sand.u32 %s246, 1
        %s421 = scalar_lea.sflag [#allocation12], %s420
        %s422 = sand.u32 %s246, 1
        %s423 = smul.addr %s422, 16
        %s424 = scalar_lea.vmem [#allocation11], %s423
        %v426 = vld [vmem:[%s363] sm:$0xf]
        %v427 = vld [vmem:[%s372] sm:$0xf]
        %v428 = vld [vmem:[#allocation7] sm:$0xf]
        %v429 = vld [vmem:[#allocation7 + $0x4] sm:$0xf]
        %v430 = vld [vmem:[#allocation7 + $0x8] sm:$0xf]
        %v431 = vld [vmem:[#allocation7 + $0xc] sm:$0xf]
        %v432 = vld [vmem:[%s3] sm:$0x1]
        %v433 = vunpack.c.l.bf16 %v432
        %v434 = vlaneseq
        %v435 = vshrl.u32 %v434, 7
        %v436 = vsub.s32 0, %v435
        %v437 = vrot.slane %v433, %v436
        %v442 = vunpack.c.l.b16 %v428
        %v443 = vunpack.c.l.b16 %v429
        %v444 = vunpack.c.l.b16 %v430
        %v445 = vunpack.c.l.b16 %v431
        %v446 = vpack.c.b16 %v443, %v442
        %v447 = vpack.c.b16 %v445, %v444
        %vm450 = vcmask 261120
        %v452 = vsel %vm450, %v426, 0
        %454 = vmatprep.subr.bf16.mxu0 0
        %455 = vmatpush1.bf16.msra.mxu0 %v446
        %456 = vmatprep.subr.bf16.mxu0 0
        %457 = vmatpush1.bf16.msra.mxu0 %v447
        %458 = vmatprep.subr.bf16.mxu0 0
        %459 = vmatpush1.bf16.msra.mxu0 0
        %460 = vmatprep.subr.bf16.mxu0 0
        %461 = vmatpush1.bf16.msra.mxu0 0
        %462 = vmatprep.subr.bf16.mxu0 0
        %463 = vmatpush1.bf16.msra.mxu0 0
        %464 = vmatprep.subr.bf16.mxu0 0
        %465 = vmatpush1.bf16.msra.mxu0 0
        %466 = vmatprep.subr.bf16.mxu0 0
        %467 = vmatpush1.bf16.msra.mxu0 0
        %468 = vmatprep.subr.bf16.mxu0 0
        %469 = vmatpush1.bf16.msra.mxu0 0
        %470 = vmatprep.subr.bf16.mxu0 0
        %471 = vmatpush1.bf16.msra.mxu0 0
        %472 = vmatprep.subr.bf16.mxu0 0
        %473 = vmatpush1.bf16.msra.mxu0 0
        %474 = vmatprep.subr.bf16.mxu0 0
        %475 = vmatpush1.bf16.msra.mxu0 0
        %476 = vmatprep.subr.bf16.mxu0 0
        %477 = vmatpush1.bf16.msra.mxu0 0
        %478 = vmatprep.subr.bf16.mxu0 0
        %479 = vmatpush1.bf16.msra.mxu0 0
        %480 = vmatprep.subr.bf16.mxu0 0
        %481 = vmatpush1.bf16.msra.mxu0 0
        %482 = vmatprep.subr.bf16.mxu0 0
        %483 = vmatpush1.bf16.msra.mxu0 0
        %484 = vmatprep.subr.bf16.mxu0 0
        %485 = vmatpush1.bf16.msra.mxu0 0
        %486 = vmatprep.mubr.bf16.mxu0 0
        %487 = vmatmul.mubr.bf16.gmra.mrb[0].mxu0 %v452
        %v488 = vpop.f32.mrb[0].mxu0
        %v489 = vadd.f32 %v437, %v488
        %v490 = vpop.f32.mrb[0].mxu0
        %v491 = vpop.f32.mrb[0].mxu0
        %v492 = vpop.f32.mrb[0].mxu0
        %493 = vdwg.mxu0
        %v494 = vld [vmem:[#allocation8] sm:$0xf]
        %v495 = vld [vmem:[#allocation8 + $0x4] sm:$0xf]
        %v496 = vld [vmem:[#allocation8 + $0x8] sm:$0xf]
        %v497 = vld [vmem:[#allocation8 + $0xc] sm:$0xf]
        %v498 = vld [vmem:[%s5] sm:$0x1]
        %v499 = vunpack.c.l.bf16 %v498
        %v500 = vlaneseq
        %v501 = vshrl.u32 %v500, 7
        %v502 = vsub.s32 0, %v501
        %v503 = vrot.slane %v499, %v502
        %v508 = vunpack.c.l.b16 %v494
        %v509 = vunpack.c.l.b16 %v495
        %v510 = vunpack.c.l.b16 %v496
        %v511 = vunpack.c.l.b16 %v497
        %v512 = vpack.c.b16 %v509, %v508
        %v513 = vpack.c.b16 %v511, %v510
        %v517 = vsel %vm450, %v427, 0
        %519 = vmatprep.subr.bf16.mxu0 0
        %520 = vmatpush1.bf16.msra.mxu0 %v512
        %521 = vmatprep.subr.bf16.mxu0 0
        %522 = vmatpush1.bf16.msra.mxu0 %v513
        %523 = vmatprep.subr.bf16.mxu0 0
        %524 = vmatpush1.bf16.msra.mxu0 0
        %525 = vmatprep.subr.bf16.mxu0 0
        %526 = vmatpush1.bf16.msra.mxu0 0
        %527 = vmatprep.subr.bf16.mxu0 0
        %528 = vmatpush1.bf16.msra.mxu0 0
        %529 = vmatprep.subr.bf16.mxu0 0
        %530 = vmatpush1.bf16.msra.mxu0 0
        %531 = vmatprep.subr.bf16.mxu0 0
        %532 = vmatpush1.bf16.msra.mxu0 0
        %533 = vmatprep.subr.bf16.mxu0 0
        %534 = vmatpush1.bf16.msra.mxu0 0
        %535 = vmatprep.subr.bf16.mxu0 0
        %536 = vmatpush1.bf16.msra.mxu0 0
        %537 = vmatprep.subr.bf16.mxu0 0
        %538 = vmatpush1.bf16.msra.mxu0 0
        %539 = vmatprep.subr.bf16.mxu0 0
        %540 = vmatpush1.bf16.msra.mxu0 0
        %541 = vmatprep.subr.bf16.mxu0 0
        %542 = vmatpush1.bf16.msra.mxu0 0
        %543 = vmatprep.subr.bf16.mxu0 0
        %544 = vmatpush1.bf16.msra.mxu0 0
        %545 = vmatprep.subr.bf16.mxu0 0
        %546 = vmatpush1.bf16.msra.mxu0 0
        %547 = vmatprep.subr.bf16.mxu0 0
        %548 = vmatpush1.bf16.msra.mxu0 0
        %549 = vmatprep.subr.bf16.mxu0 0
        %550 = vmatpush1.bf16.msra.mxu0 0
        %551 = vmatprep.mubr.bf16.mxu0 0
        %552 = vmatmul.mubr.bf16.gmra.mrb[0].mxu0 %v517
        %v553 = vpop.f32.mrb[0].mxu0
        %v554 = vadd.f32 %v503, %v553
        %v555 = vpop.f32.mrb[0].mxu0
        %v556 = vpop.f32.mrb[0].mxu0
        %v557 = vpop.f32.mrb[0].mxu0
        %558 = vdwg.mxu0
        %v559 = vpack.c.bf16 %v489, %v489
        %v560 = vpack.c.bf16 %v554, %v554
        %v561 = vld [vmem:[%s6] sm:$0xf]
        %v562 = vld [vmem:[%s6 + $0x4] sm:$0xf]
        %v563 = vld [vmem:[%s6 + $0x8] sm:$0xf]
        %v564 = vld [vmem:[%s6 + $0xc] sm:$0xf]
        %vm565 = vcmask 64512
        %v567 = vsel %vm565, %v559, 0
        %v570 = vsel %vm565, %v560, 0
        %572 = vmatprep.subr.bf16.mxu0 0
        %573 = vmatpush1.bf16.xpose.msra.mxu0 %v570
        %574 = vmatprep.subr.bf16.mxu0 0
        %575 = vmatpush1.bf16.xpose.msra.mxu0 0
        %576 = vmatprep.subr.bf16.mxu0 0
        %577 = vmatpush1.bf16.xpose.msra.mxu0 0
        %578 = vmatprep.subr.bf16.mxu0 0
        %579 = vmatpush1.bf16.xpose.msra.mxu0 0
        %580 = vmatprep.subr.bf16.mxu0 0
        %581 = vmatpush1.bf16.xpose.msra.mxu0 0
        %582 = vmatprep.subr.bf16.mxu0 0
        %583 = vmatpush1.bf16.xpose.msra.mxu0 0
        %584 = vmatprep.subr.bf16.mxu0 0
        %585 = vmatpush1.bf16.xpose.msra.mxu0 0
        %586 = vmatprep.subr.bf16.mxu0 0
        %587 = vmatpush1.bf16.xpose.msra.mxu0 0
        %588 = vmatprep.subr.bf16.mxu0 0
        %589 = vmatpush1.bf16.xpose.msra.mxu0 0
        %590 = vmatprep.subr.bf16.mxu0 0
        %591 = vmatpush1.bf16.xpose.msra.mxu0 0
        %592 = vmatprep.subr.bf16.mxu0 0
        %593 = vmatpush1.bf16.xpose.msra.mxu0 0
        %594 = vmatprep.subr.bf16.mxu0 0
        %595 = vmatpush1.bf16.xpose.msra.mxu0 0
        %596 = vmatprep.subr.bf16.mxu0 0
        %597 = vmatpush1.bf16.xpose.msra.mxu0 0
        %598 = vmatprep.subr.bf16.mxu0 0
        %599 = vmatpush1.bf16.xpose.msra.mxu0 0
        %600 = vmatprep.subr.bf16.mxu0 0
        %601 = vmatpush1.bf16.xpose.msra.mxu0 0
        %602 = vmatprep.subr.bf16.mxu0 0
        %603 = vmatpush1.bf16.xpose.msra.mxu0 0
        %604 = vmatprep.mubr.bf16.mxu0 0
        %605 = vmatmul.mubr.bf16.gmra.mrb[0].mxu0 %v567
        %v606 = vpop.f32.mrb[0].mxu0
        %v607 = vadd.f32 0.0, %v606
        %v608 = vpop.f32.mrb[0].mxu0
        %v609 = vpop.f32.mrb[0].mxu0
        %v610 = vpop.f32.mrb[0].mxu0
        %611 = vdwg.mxu0
        %v612 = vmul.f32 %v607, 0.35355338
        %v613 = vsel %vm565, %v612, -inf
        %614 = vmax.xlane.f32.xlu0 %v613
        %v615 = vpop.xlane.xlu0 %614
        %v616 = vsub.f32 %v612, %v615
        %v617 = vmul.f32 %v616, 1.442695
        %v618 = vpow.pop %v617
        %v619 = vsel %vm565, %v618, 0.0
        %620 = vadd.xlane.f32.xlu0 %v619
        %v621 = vpop.xlane.xlu0 %620
        %v622 = vrcp.pop %v621
        %v623 = vmul.f32 %v618, %v622
        %v624 = vpack.c.bf16 %v623, %v623
        %vm625 = vcmask 60416
        %626 = vst.msk [vmem:[%s424] sm:$0xf] %vm625, %v624
        %628 = vrot.lane.b32.xlu0 %v560, 96
        %v629 = vpop.permute.xlu0 %628
        %v631 = vsel %vm565, %v624, 0
        %vm633 = vcmask 1043456
        %v635 = vsel %vm633, %v629, 0
        %637 = vmatprep.subr.bf16.mxu0 0
        %638 = vmatpush1.bf16.msra.mxu0 %v635
        %639 = vmatprep.subr.bf16.mxu0 0
        %640 = vmatpush1.bf16.msra.mxu0 0
        %641 = vmatprep.subr.bf16.mxu0 0
        %642 = vmatpush1.bf16.msra.mxu0 0
        %643 = vmatprep.subr.bf16.mxu0 0
        %644 = vmatpush1.bf16.msra.mxu0 0
        %645 = vmatprep.subr.bf16.mxu0 0
        %646 = vmatpush1.bf16.msra.mxu0 0
        %647 = vmatprep.subr.bf16.mxu0 0
        %648 = vmatpush1.bf16.msra.mxu0 0
        %649 = vmatprep.subr.bf16.mxu0 0
        %650 = vmatpush1.bf16.msra.mxu0 0
        %651 = vmatprep.subr.bf16.mxu0 0
        %652 = vmatpush1.bf16.msra.mxu0 0
        %653 = vmatprep.subr.bf16.mxu0 0
        %654 = vmatpush1.bf16.msra.mxu0 0
        %655 = vmatprep.subr.bf16.mxu0 0
        %656 = vmatpush1.bf16.msra.mxu0 0
        %657 = vmatprep.subr.bf16.mxu0 0
        %658 = vmatpush1.bf16.msra.mxu0 0
        %659 = vmatprep.subr.bf16.mxu0 0
        %660 = vmatpush1.bf16.msra.mxu0 0
        %661 = vmatprep.subr.bf16.mxu0 0
        %662 = vmatpush1.bf16.msra.mxu0 0
        %663 = vmatprep.subr.bf16.mxu0 0
        %664 = vmatpush1.bf16.msra.mxu0 0
        %665 = vmatprep.subr.bf16.mxu0 0
        %666 = vmatpush1.bf16.msra.mxu0 0
        %667 = vmatprep.subr.bf16.mxu0 0
        %668 = vmatpush1.bf16.msra.mxu0 0
        %669 = vmatprep.mubr.bf16.mxu0 0
        %670 = vmatmul.mubr.bf16.gmra.mrb[0].mxu0 %v631
        %v671 = vpop.f32.mrb[0].mxu0
        %v672 = vadd.f32 0.0, %v671
        %v673 = vpop.f32.mrb[0].mxu0
        %v674 = vpop.f32.mrb[0].mxu0
        %v675 = vpop.f32.mrb[0].mxu0
        %676 = vdwg.mxu0
        %v677 = vpack.c.bf16 %v672, %v672
        %679 = vrot.lane.b32.xlu0 %v559, 120
        %v680 = vpop.permute.xlu0 %679
        %681 = vrot.lane.b32.xlu0 %v560, 120
        %v682 = vpop.permute.xlu0 %681
        %v684 = vsel %vm565, %v680, 0
        %v687 = vsel %vm565, %v682, 0
        %689 = vmatprep.subr.bf16.mxu0 0
        %690 = vmatpush1.bf16.xpose.msra.mxu0 %v687
        %691 = vmatprep.subr.bf16.mxu0 0
        %692 = vmatpush1.bf16.xpose.msra.mxu0 0
        %693 = vmatprep.subr.bf16.mxu0 0
        %694 = vmatpush1.bf16.xpose.msra.mxu0 0
        %695 = vmatprep.subr.bf16.mxu0 0
        %696 = vmatpush1.bf16.xpose.msra.mxu0 0
        %697 = vmatprep.subr.bf16.mxu0 0
        %698 = vmatpush1.bf16.xpose.msra.mxu0 0
        %699 = vmatprep.subr.bf16.mxu0 0
        %700 = vmatpush1.bf16.xpose.msra.mxu0 0
        %701 = vmatprep.subr.bf16.mxu0 0
        %702 = vmatpush1.bf16.xpose.msra.mxu0 0
        %703 = vmatprep.subr.bf16.mxu0 0
        %704 = vmatpush1.bf16.xpose.msra.mxu0 0
        %705 = vmatprep.subr.bf16.mxu0 0
        %706 = vmatpush1.bf16.xpose.msra.mxu0 0
        %707 = vmatprep.subr.bf16.mxu0 0
        %708 = vmatpush1.bf16.xpose.msra.mxu0 0
        %709 = vmatprep.subr.bf16.mxu0 0
        %710 = vmatpush1.bf16.xpose.msra.mxu0 0
        %711 = vmatprep.subr.bf16.mxu0 0
        %712 = vmatpush1.bf16.xpose.msra.mxu0 0
        %713 = vmatprep.subr.bf16.mxu0 0
        %714 = vmatpush1.bf16.xpose.msra.mxu0 0
        %715 = vmatprep.subr.bf16.mxu0 0
        %716 = vmatpush1.bf16.xpose.msra.mxu0 0
        %717 = vmatprep.subr.bf16.mxu0 0
        %718 = vmatpush1.bf16.xpose.msra.mxu0 0
        %719 = vmatprep.subr.bf16.mxu0 0
        %720 = vmatpush1.bf16.xpose.msra.mxu0 0
        %721 = vmatprep.mubr.bf16.mxu0 0
        %722 = vmatmul.mubr.bf16.gmra.mrb[0].mxu0 %v684
        %v723 = vpop.f32.mrb[0].mxu0
        %v724 = vadd.f32 0.0, %v723
        %v725 = vpop.f32.mrb[0].mxu0
        %v726 = vpop.f32.mrb[0].mxu0
        %v727 = vpop.f32.mrb[0].mxu0
        %728 = vdwg.mxu0
        %v729 = vmul.f32 %v724, 0.35355338
        %v730 = vsel %vm565, %v729, -inf
        %731 = vmax.xlane.f32.xlu0 %v730
        %v732 = vpop.xlane.xlu0 %731
        %v733 = vsub.f32 %v729, %v732
        %v734 = vmul.f32 %v733, 1.442695
        %v735 = vpow.pop %v734
        %v736 = vsel %vm565, %v735, 0.0
        %737 = vadd.xlane.f32.xlu0 %v736
        %v738 = vpop.xlane.xlu0 %737
        %v739 = vrcp.pop %v738
        %v740 = vmul.f32 %v735, %v739
        %v741 = vpack.c.bf16 %v740, %v740
        %s742 = scalar_lea.vmem %s424, 4 [#allocation11]
        %743 = vst.msk [vmem:[%s742] sm:$0xf] %vm625, %v741
        %744 = vrot.lane.b32.xlu0 %v560, 88
        %v745 = vpop.permute.xlu0 %744
        %v747 = vsel %vm565, %v741, 0
        %v750 = vsel %vm633, %v745, 0
        %752 = vmatprep.subr.bf16.mxu0 0
        %753 = vmatpush1.bf16.msra.mxu0 %v750
        %754 = vmatprep.subr.bf16.mxu0 0
        %755 = vmatpush1.bf16.msra.mxu0 0
        %756 = vmatprep.subr.bf16.mxu0 0
        %757 = vmatpush1.bf16.msra.mxu0 0
        %758 = vmatprep.subr.bf16.mxu0 0
        %759 = vmatpush1.bf16.msra.mxu0 0
        %760 = vmatprep.subr.bf16.mxu0 0
        %761 = vmatpush1.bf16.msra.mxu0 0
        %762 = vmatprep.subr.bf16.mxu0 0
        %763 = vmatpush1.bf16.msra.mxu0 0
        %764 = vmatprep.subr.bf16.mxu0 0
        %765 = vmatpush1.bf16.msra.mxu0 0
        %766 = vmatprep.subr.bf16.mxu0 0
        %767 = vmatpush1.bf16.msra.mxu0 0
        %768 = vmatprep.subr.bf16.mxu0 0
        %769 = vmatpush1.bf16.msra.mxu0 0
        %770 = vmatprep.subr.bf16.mxu0 0
        %771 = vmatpush1.bf16.msra.mxu0 0
        %772 = vmatprep.subr.bf16.mxu0 0
        %773 = vmatpush1.bf16.msra.mxu0 0
        %774 = vmatprep.subr.bf16.mxu0 0
        %775 = vmatpush1.bf16.msra.mxu0 0
        %776 = vmatprep.subr.bf16.mxu0 0
        %777 = vmatpush1.bf16.msra.mxu0 0
        %778 = vmatprep.subr.bf16.mxu0 0
        %779 = vmatpush1.bf16.msra.mxu0 0
        %780 = vmatprep.subr.bf16.mxu0 0
        %781 = vmatpush1.bf16.msra.mxu0 0
        %782 = vmatprep.subr.bf16.mxu0 0
        %783 = vmatpush1.bf16.msra.mxu0 0
        %784 = vmatprep.mubr.bf16.mxu0 0
        %785 = vmatmul.mubr.bf16.gmra.mrb[0].mxu0 %v747
        %v786 = vpop.f32.mrb[0].mxu0
        %v787 = vadd.f32 0.0, %v786
        %v788 = vpop.f32.mrb[0].mxu0
        %v789 = vpop.f32.mrb[0].mxu0
        %v790 = vpop.f32.mrb[0].mxu0
        %791 = vdwg.mxu0
        %v792 = vpack.c.bf16 %v787, %v787
        %v794 = vsel %vm565, %v792, 0
        %v797 = vsel %vm633, %v562, 0
        %799 = vmatprep.subr.bf16.mxu0 0
        %800 = vmatpush1.bf16.msra.mxu0 %v797
        %801 = vmatprep.subr.bf16.mxu0 0
        %802 = vmatpush1.bf16.msra.mxu0 0
        %803 = vmatprep.subr.bf16.mxu0 0
        %804 = vmatpush1.bf16.msra.mxu0 0
        %805 = vmatprep.subr.bf16.mxu0 0
        %806 = vmatpush1.bf16.msra.mxu0 0
        %807 = vmatprep.subr.bf16.mxu0 0
        %808 = vmatpush1.bf16.msra.mxu0 0
        %809 = vmatprep.subr.bf16.mxu0 0
        %810 = vmatpush1.bf16.msra.mxu0 0
        %811 = vmatprep.subr.bf16.mxu0 0
        %812 = vmatpush1.bf16.msra.mxu0 0
        %813 = vmatprep.subr.bf16.mxu0 0
        %814 = vmatpush1.bf16.msra.mxu0 0
        %815 = vmatprep.subr.bf16.mxu0 0
        %816 = vmatpush1.bf16.msra.mxu0 0
        %817 = vmatprep.subr.bf16.mxu0 0
        %818 = vmatpush1.bf16.msra.mxu0 0
        %819 = vmatprep.subr.bf16.mxu0 0
        %820 = vmatpush1.bf16.msra.mxu0 0
        %821 = vmatprep.subr.bf16.mxu0 0
        %822 = vmatpush1.bf16.msra.mxu0 0
        %823 = vmatprep.subr.bf16.mxu0 0
        %824 = vmatpush1.bf16.msra.mxu0 0
        %825 = vmatprep.subr.bf16.mxu0 0
        %826 = vmatpush1.bf16.msra.mxu0 0
        %827 = vmatprep.subr.bf16.mxu0 0
        %828 = vmatpush1.bf16.msra.mxu0 0
        %829 = vmatprep.subr.bf16.mxu0 0
        %830 = vmatpush1.bf16.msra.mxu0 0
        %831 = vmatprep.mubr.bf16.mxu0 0
        %832 = vmatmul.mubr.bf16.gmra.mrb[0].mxu0 %v794
        %v833 = vpop.f32.mrb[0].mxu0
        %v834 = vadd.f32 0.0, %v833
        %v835 = vpop.f32.mrb[0].mxu0
        %v836 = vpop.f32.mrb[0].mxu0
        %v837 = vpop.f32.mrb[0].mxu0
        %838 = vdwg.mxu0
        %v840 = vsel %vm565, %v677, 0
        %v843 = vsel %vm633, %v561, 0
        %845 = vmatprep.subr.bf16.mxu0 0
        %846 = vmatpush1.bf16.msra.mxu0 %v843
        %847 = vmatprep.subr.bf16.mxu0 0
        %848 = vmatpush1.bf16.msra.mxu0 0
        %849 = vmatprep.subr.bf16.mxu0 0
        %850 = vmatpush1.bf16.msra.mxu0 0
        %851 = vmatprep.subr.bf16.mxu0 0
        %852 = vmatpush1.bf16.msra.mxu0 0
        %853 = vmatprep.subr.bf16.mxu0 0
        %854 = vmatpush1.bf16.msra.mxu0 0
        %855 = vmatprep.subr.bf16.mxu0 0
        %856 = vmatpush1.bf16.msra.mxu0 0
        %857 = vmatprep.subr.bf16.mxu0 0
        %858 = vmatpush1.bf16.msra.mxu0 0
        %859 = vmatprep.subr.bf16.mxu0 0
        %860 = vmatpush1.bf16.msra.mxu0 0
        %861 = vmatprep.subr.bf16.mxu0 0
        %862 = vmatpush1.bf16.msra.mxu0 0
        %863 = vmatprep.subr.bf16.mxu0 0
        %864 = vmatpush1.bf16.msra.mxu0 0
        %865 = vmatprep.subr.bf16.mxu0 0
        %866 = vmatpush1.bf16.msra.mxu0 0
        %867 = vmatprep.subr.bf16.mxu0 0
        %868 = vmatpush1.bf16.msra.mxu0 0
        %869 = vmatprep.subr.bf16.mxu0 0
        %870 = vmatpush1.bf16.msra.mxu0 0
        %871 = vmatprep.subr.bf16.mxu0 0
        %872 = vmatpush1.bf16.msra.mxu0 0
        %873 = vmatprep.subr.bf16.mxu0 0
        %874 = vmatpush1.bf16.msra.mxu0 0
        %875 = vmatprep.subr.bf16.mxu0 0
        %876 = vmatpush1.bf16.msra.mxu0 0
        %877 = vmatprep.mubr.bf16.mxu0 0
        %878 = vmatmul.mubr.bf16.gmra.mrb[0].mxu0 %v840
        %v879 = vpop.f32.mrb[0].mxu0
        %v880 = vadd.f32 %v834, %v879
        %v881 = vpop.f32.mrb[0].mxu0
        %v882 = vpop.f32.mrb[0].mxu0
        %v883 = vpop.f32.mrb[0].mxu0
        %884 = vdwg.mxu0
        %885 = vrot.lane.b32.xlu0 %v559, 112
        %v886 = vpop.permute.xlu0 %885
        %887 = vrot.lane.b32.xlu0 %v560, 112
        %v888 = vpop.permute.xlu0 %887
        %v890 = vsel %vm565, %v886, 0
        %v893 = vsel %vm565, %v888, 0
        %895 = vmatprep.subr.bf16.mxu0 0
        %896 = vmatpush1.bf16.xpose.msra.mxu0 %v893
        %897 = vmatprep.subr.bf16.mxu0 0
        %898 = vmatpush1.bf16.xpose.msra.mxu0 0
        %899 = vmatprep.subr.bf16.mxu0 0
        %900 = vmatpush1.bf16.xpose.msra.mxu0 0
        %901 = vmatprep.subr.bf16.mxu0 0
        %902 = vmatpush1.bf16.xpose.msra.mxu0 0
        %903 = vmatprep.subr.bf16.mxu0 0
        %904 = vmatpush1.bf16.xpose.msra.mxu0 0
        %905 = vmatprep.subr.bf16.mxu0 0
        %906 = vmatpush1.bf16.xpose.msra.mxu0 0
        %907 = vmatprep.subr.bf16.mxu0 0
        %908 = vmatpush1.bf16.xpose.msra.mxu0 0
        %909 = vmatprep.subr.bf16.mxu0 0
        %910 = vmatpush1.bf16.xpose.msra.mxu0 0
        %911 = vmatprep.subr.bf16.mxu0 0
        %912 = vmatpush1.bf16.xpose.msra.mxu0 0
        %913 = vmatprep.subr.bf16.mxu0 0
        %914 = vmatpush1.bf16.xpose.msra.mxu0 0
        %915 = vmatprep.subr.bf16.mxu0 0
        %916 = vmatpush1.bf16.xpose.msra.mxu0 0
        %917 = vmatprep.subr.bf16.mxu0 0
        %918 = vmatpush1.bf16.xpose.msra.mxu0 0
        %919 = vmatprep.subr.bf16.mxu0 0
        %920 = vmatpush1.bf16.xpose.msra.mxu0 0
        %921 = vmatprep.subr.bf16.mxu0 0
        %922 = vmatpush1.bf16.xpose.msra.mxu0 0
        %923 = vmatprep.subr.bf16.mxu0 0
        %924 = vmatpush1.bf16.xpose.msra.mxu0 0
        %925 = vmatprep.subr.bf16.mxu0 0
        %926 = vmatpush1.bf16.xpose.msra.mxu0 0
        %927 = vmatprep.mubr.bf16.mxu0 0
        %928 = vmatmul.mubr.bf16.gmra.mrb[0].mxu0 %v890
        %v929 = vpop.f32.mrb[0].mxu0
        %v930 = vadd.f32 0.0, %v929
        %v931 = vpop.f32.mrb[0].mxu0
        %v932 = vpop.f32.mrb[0].mxu0
        %v933 = vpop.f32.mrb[0].mxu0
        %934 = vdwg.mxu0
        %v935 = vmul.f32 %v930, 0.35355338
        %v936 = vsel %vm565, %v935, -inf
        %937 = vmax.xlane.f32.xlu0 %v936
        %v938 = vpop.xlane.xlu0 %937
        %v939 = vsub.f32 %v935, %v938
        %v940 = vmul.f32 %v939, 1.442695
        %v941 = vpow.pop %v940
        %v942 = vsel %vm565, %v941, 0.0
        %943 = vadd.xlane.f32.xlu0 %v942
        %v944 = vpop.xlane.xlu0 %943
        %v945 = vrcp.pop %v944
        %v946 = vmul.f32 %v941, %v945
        %v947 = vpack.c.bf16 %v946, %v946
        %s948 = scalar_lea.vmem %s424, 8 [#allocation11]
        %949 = vst.msk [vmem:[%s948] sm:$0xf] %vm625, %v947
        %950 = vrot.lane.b32.xlu0 %v560, 80
        %v951 = vpop.permute.xlu0 %950
        %v953 = vsel %vm565, %v947, 0
        %v956 = vsel %vm633, %v951, 0
        %958 = vmatprep.subr.bf16.mxu0 0
        %959 = vmatpush1.bf16.msra.mxu0 %v956
        %960 = vmatprep.subr.bf16.mxu0 0
        %961 = vmatpush1.bf16.msra.mxu0 0
        %962 = vmatprep.subr.bf16.mxu0 0
        %963 = vmatpush1.bf16.msra.mxu0 0
        %964 = vmatprep.subr.bf16.mxu0 0
        %965 = vmatpush1.bf16.msra.mxu0 0
        %966 = vmatprep.subr.bf16.mxu0 0
        %967 = vmatpush1.bf16.msra.mxu0 0
        %968 = vmatprep.subr.bf16.mxu0 0
        %969 = vmatpush1.bf16.msra.mxu0 0
        %970 = vmatprep.subr.bf16.mxu0 0
        %971 = vmatpush1.bf16.msra.mxu0 0
        %972 = vmatprep.subr.bf16.mxu0 0
        %973 = vmatpush1.bf16.msra.mxu0 0
        %974 = vmatprep.subr.bf16.mxu0 0
        %975 = vmatpush1.bf16.msra.mxu0 0
        %976 = vmatprep.subr.bf16.mxu0 0
        %977 = vmatpush1.bf16.msra.mxu0 0
        %978 = vmatprep.subr.bf16.mxu0 0
        %979 = vmatpush1.bf16.msra.mxu0 0
        %980 = vmatprep.subr.bf16.mxu0 0
        %981 = vmatpush1.bf16.msra.mxu0 0
        %982 = vmatprep.subr.bf16.mxu0 0
        %983 = vmatpush1.bf16.msra.mxu0 0
        %984 = vmatprep.subr.bf16.mxu0 0
        %985 = vmatpush1.bf16.msra.mxu0 0
        %986 = vmatprep.subr.bf16.mxu0 0
        %987 = vmatpush1.bf16.msra.mxu0 0
        %988 = vmatprep.subr.bf16.mxu0 0
        %989 = vmatpush1.bf16.msra.mxu0 0
        %990 = vmatprep.mubr.bf16.mxu0 0
        %991 = vmatmul.mubr.bf16.gmra.mrb[0].mxu0 %v953
        %v992 = vpop.f32.mrb[0].mxu0
        %v993 = vadd.f32 0.0, %v992
        %v994 = vpop.f32.mrb[0].mxu0
        %v995 = vpop.f32.mrb[0].mxu0
        %v996 = vpop.f32.mrb[0].mxu0
        %997 = vdwg.mxu0
        %v998 = vpack.c.bf16 %v993, %v993
        %v1000 = vsel %vm565, %v998, 0
        %v1003 = vsel %vm633, %v563, 0
        %1005 = vmatprep.subr.bf16.mxu0 0
        %1006 = vmatpush1.bf16.msra.mxu0 %v1003
        %1007 = vmatprep.subr.bf16.mxu0 0
        %1008 = vmatpush1.bf16.msra.mxu0 0
        %1009 = vmatprep.subr.bf16.mxu0 0
        %1010 = vmatpush1.bf16.msra.mxu0 0
        %1011 = vmatprep.subr.bf16.mxu0 0
        %1012 = vmatpush1.bf16.msra.mxu0 0
        %1013 = vmatprep.subr.bf16.mxu0 0
        %1014 = vmatpush1.bf16.msra.mxu0 0
        %1015 = vmatprep.subr.bf16.mxu0 0
        %1016 = vmatpush1.bf16.msra.mxu0 0
        %1017 = vmatprep.subr.bf16.mxu0 0
        %1018 = vmatpush1.bf16.msra.mxu0 0
        %1019 = vmatprep.subr.bf16.mxu0 0
        %1020 = vmatpush1.bf16.msra.mxu0 0
        %1021 = vmatprep.subr.bf16.mxu0 0
        %1022 = vmatpush1.bf16.msra.mxu0 0
        %1023 = vmatprep.subr.bf16.mxu0 0
        %1024 = vmatpush1.bf16.msra.mxu0 0
        %1025 = vmatprep.subr.bf16.mxu0 0
        %1026 = vmatpush1.bf16.msra.mxu0 0
        %1027 = vmatprep.subr.bf16.mxu0 0
        %1028 = vmatpush1.bf16.msra.mxu0 0
        %1029 = vmatprep.subr.bf16.mxu0 0
        %1030 = vmatpush1.bf16.msra.mxu0 0
        %1031 = vmatprep.subr.bf16.mxu0 0
        %1032 = vmatpush1.bf16.msra.mxu0 0
        %1033 = vmatprep.subr.bf16.mxu0 0
        %1034 = vmatpush1.bf16.msra.mxu0 0
        %1035 = vmatprep.subr.bf16.mxu0 0
        %1036 = vmatpush1.bf16.msra.mxu0 0
        %1037 = vmatprep.mubr.bf16.mxu0 0
        %1038 = vmatmul.mubr.bf16.gmra.mrb[0].mxu0 %v1000
        %v1039 = vpop.f32.mrb[0].mxu0
        %v1040 = vadd.f32 0.0, %v1039
        %v1041 = vpop.f32.mrb[0].mxu0
        %v1042 = vpop.f32.mrb[0].mxu0
        %v1043 = vpop.f32.mrb[0].mxu0
        %1044 = vdwg.mxu0
        %v1045 = vadd.f32 %v880, %v1040
        %1046 = vrot.lane.b32.xlu0 %v559, 104
        %v1047 = vpop.permute.xlu0 %1046
        %1048 = vrot.lane.b32.xlu0 %v560, 104
        %v1049 = vpop.permute.xlu0 %1048
        %v1051 = vsel %vm565, %v1047, 0
        %v1054 = vsel %vm565, %v1049, 0
        %1056 = vmatprep.subr.bf16.mxu0 0
        %1057 = vmatpush1.bf16.xpose.msra.mxu0 %v1054
        %1058 = vmatprep.subr.bf16.mxu0 0
        %1059 = vmatpush1.bf16.xpose.msra.mxu0 0
        %1060 = vmatprep.subr.bf16.mxu0 0
        %1061 = vmatpush1.bf16.xpose.msra.mxu0 0
        %1062 = vmatprep.subr.bf16.mxu0 0
        %1063 = vmatpush1.bf16.xpose.msra.mxu0 0
        %1064 = vmatprep.subr.bf16.mxu0 0
        %1065 = vmatpush1.bf16.xpose.msra.mxu0 0
        %1066 = vmatprep.subr.bf16.mxu0 0
        %1067 = vmatpush1.bf16.xpose.msra.mxu0 0
        %1068 = vmatprep.subr.bf16.mxu0 0
        %1069 = vmatpush1.bf16.xpose.msra.mxu0 0
        %1070 = vmatprep.subr.bf16.mxu0 0
        %1071 = vmatpush1.bf16.xpose.msra.mxu0 0
        %1072 = vmatprep.subr.bf16.mxu0 0
        %1073 = vmatpush1.bf16.xpose.msra.mxu0 0
        %1074 = vmatprep.subr.bf16.mxu0 0
        %1075 = vmatpush1.bf16.xpose.msra.mxu0 0
        %1076 = vmatprep.subr.bf16.mxu0 0
        %1077 = vmatpush1.bf16.xpose.msra.mxu0 0
        %1078 = vmatprep.subr.bf16.mxu0 0
        %1079 = vmatpush1.bf16.xpose.msra.mxu0 0
        %1080 = vmatprep.subr.bf16.mxu0 0
        %1081 = vmatpush1.bf16.xpose.msra.mxu0 0
        %1082 = vmatprep.subr.bf16.mxu0 0
        %1083 = vmatpush1.bf16.xpose.msra.mxu0 0
        %1084 = vmatprep.subr.bf16.mxu0 0
        %1085 = vmatpush1.bf16.xpose.msra.mxu0 0
        %1086 = vmatprep.subr.bf16.mxu0 0
        %1087 = vmatpush1.bf16.xpose.msra.mxu0 0
        %1088 = vmatprep.mubr.bf16.mxu0 0
        %1089 = vmatmul.mubr.bf16.gmra.mrb[0].mxu0 %v1051
        %v1090 = vpop.f32.mrb[0].mxu0
        %v1091 = vadd.f32 0.0, %v1090
        %v1092 = vpop.f32.mrb[0].mxu0
        %v1093 = vpop.f32.mrb[0].mxu0
        %v1094 = vpop.f32.mrb[0].mxu0
        %1095 = vdwg.mxu0
        %v1096 = vmul.f32 %v1091, 0.35355338
        %v1097 = vsel %vm565, %v1096, -inf
        %1098 = vmax.xlane.f32.xlu0 %v1097
        %v1099 = vpop.xlane.xlu0 %1098
        %v1100 = vsub.f32 %v1096, %v1099
        %v1101 = vmul.f32 %v1100, 1.442695
        %v1102 = vpow.pop %v1101
        %v1103 = vsel %vm565, %v1102, 0.0
        %1104 = vadd.xlane.f32.xlu0 %v1103
        %v1105 = vpop.xlane.xlu0 %1104
        %v1106 = vrcp.pop %v1105
        %v1107 = vmul.f32 %v1102, %v1106
        %v1108 = vpack.c.bf16 %v1107, %v1107
        %s1109 = scalar_lea.vmem %s424, 12 [#allocation11]
        %1110 = vst.msk [vmem:[%s1109] sm:$0xf] %vm625, %v1108
        %1111 = vrot.lane.b32.xlu0 %v560, 72
        %v1112 = vpop.permute.xlu0 %1111
        %v1114 = vsel %vm565, %v1108, 0
        %v1117 = vsel %vm633, %v1112, 0
        %1119 = vmatprep.subr.bf16.mxu0 0
        %1120 = vmatpush1.bf16.msra.mxu0 %v1117
        %1121 = vmatprep.subr.bf16.mxu0 0
        %1122 = vmatpush1.bf16.msra.mxu0 0
        %1123 = vmatprep.subr.bf16.mxu0 0
        %1124 = vmatpush1.bf16.msra.mxu0 0
        %1125 = vmatprep.subr.bf16.mxu0 0
        %1126 = vmatpush1.bf16.msra.mxu0 0
        %1127 = vmatprep.subr.bf16.mxu0 0
        %1128 = vmatpush1.bf16.msra.mxu0 0
        %1129 = vmatprep.subr.bf16.mxu0 0
        %1130 = vmatpush1.bf16.msra.mxu0 0
        %1131 = vmatprep.subr.bf16.mxu0 0
        %1132 = vmatpush1.bf16.msra.mxu0 0
        %1133 = vmatprep.subr.bf16.mxu0 0
        %1134 = vmatpush1.bf16.msra.mxu0 0
        %1135 = vmatprep.subr.bf16.mxu0 0
        %1136 = vmatpush1.bf16.msra.mxu0 0
        %1137 = vmatprep.subr.bf16.mxu0 0
        %1138 = vmatpush1.bf16.msra.mxu0 0
        %1139 = vmatprep.subr.bf16.mxu0 0
        %1140 = vmatpush1.bf16.msra.mxu0 0
        %1141 = vmatprep.subr.bf16.mxu0 0
        %1142 = vmatpush1.bf16.msra.mxu0 0
        %1143 = vmatprep.subr.bf16.mxu0 0
        %1144 = vmatpush1.bf16.msra.mxu0 0
        %1145 = vmatprep.subr.bf16.mxu0 0
        %1146 = vmatpush1.bf16.msra.mxu0 0
        %1147 = vmatprep.subr.bf16.mxu0 0
        %1148 = vmatpush1.bf16.msra.mxu0 0
        %1149 = vmatprep.subr.bf16.mxu0 0
        %1150 = vmatpush1.bf16.msra.mxu0 0
        %1151 = vmatprep.mubr.bf16.mxu0 0
        %1152 = vmatmul.mubr.bf16.gmra.mrb[0].mxu0 %v1114
        %v1153 = vpop.f32.mrb[0].mxu0
        %v1154 = vadd.f32 0.0, %v1153
        %v1155 = vpop.f32.mrb[0].mxu0
        %v1156 = vpop.f32.mrb[0].mxu0
        %v1157 = vpop.f32.mrb[0].mxu0
        %1158 = vdwg.mxu0
        %v1159 = vpack.c.bf16 %v1154, %v1154
        %v1161 = vsel %vm565, %v1159, 0
        %v1164 = vsel %vm633, %v564, 0
        %1166 = vmatprep.subr.bf16.mxu0 0
        %1167 = vmatpush1.bf16.msra.mxu0 %v1164
        %1168 = vmatprep.subr.bf16.mxu0 0
        %1169 = vmatpush1.bf16.msra.mxu0 0
        %1170 = vmatprep.subr.bf16.mxu0 0
        %1171 = vmatpush1.bf16.msra.mxu0 0
        %1172 = vmatprep.subr.bf16.mxu0 0
        %1173 = vmatpush1.bf16.msra.mxu0 0
        %1174 = vmatprep.subr.bf16.mxu0 0
        %1175 = vmatpush1.bf16.msra.mxu0 0
        %1176 = vmatprep.subr.bf16.mxu0 0
        %1177 = vmatpush1.bf16.msra.mxu0 0
        %1178 = vmatprep.subr.bf16.mxu0 0
        %1179 = vmatpush1.bf16.msra.mxu0 0
        %1180 = vmatprep.subr.bf16.mxu0 0
        %1181 = vmatpush1.bf16.msra.mxu0 0
        %1182 = vmatprep.subr.bf16.mxu0 0
        %1183 = vmatpush1.bf16.msra.mxu0 0
        %1184 = vmatprep.subr.bf16.mxu0 0
        %1185 = vmatpush1.bf16.msra.mxu0 0
        %1186 = vmatprep.subr.bf16.mxu0 0
        %1187 = vmatpush1.bf16.msra.mxu0 0
        %1188 = vmatprep.subr.bf16.mxu0 0
        %1189 = vmatpush1.bf16.msra.mxu0 0
        %1190 = vmatprep.subr.bf16.mxu0 0
        %1191 = vmatpush1.bf16.msra.mxu0 0
        %1192 = vmatprep.subr.bf16.mxu0 0
        %1193 = vmatpush1.bf16.msra.mxu0 0
        %1194 = vmatprep.subr.bf16.mxu0 0
        %1195 = vmatpush1.bf16.msra.mxu0 0
        %1196 = vmatprep.subr.bf16.mxu0 0
        %1197 = vmatpush1.bf16.msra.mxu0 0
        %1198 = vmatprep.mubr.bf16.mxu0 0
        %1199 = vmatmul.mubr.bf16.gmra.mrb[0].mxu0 %v1161
        %v1200 = vpop.f32.mrb[0].mxu0
        %v1201 = vadd.f32 0.0, %v1200
        %v1202 = vpop.f32.mrb[0].mxu0
        %v1203 = vpop.f32.mrb[0].mxu0
        %v1204 = vpop.f32.mrb[0].mxu0
        %1205 = vdwg.mxu0
        %v1206 = vadd.f32 %v1045, %v1201
        %v1207 = vld [vmem:[%s7] sm:$0x1]
        %v1208 = vunpack.c.l.bf16 %v1207
        %v1209 = vlaneseq
        %v1210 = vshrl.u32 %v1209, 7
        %v1211 = vsub.s32 0, %v1210
        %v1212 = vrot.slane %v1208, %v1211
        %v1213 = vadd.f32 %v1206, %v1212
        %v1214 = vpack.c.bf16 %v1213, %v1213
        %vm1215 = vcmask 257024
        %1216 = vst.msk [vmem:[%s417] sm:$0xf] %vm1215, %v1214
        %s1217 = sand.u32 %s220, 1
        %s1218 = scalar_lea.sflag [#allocation4], %s1217
        %s1219 = sand.u32 %s220, 1
        %s1220 = smul.addr %s1219, 4
        %s1221 = scalar_lea.vmem [#allocation10], %s1220
        %s1222 = sand.u32 %s246, 1
        %s1223 = scalar_lea.sflag [#allocation12], %s1222
        %s1224 = sand.u32 %s246, 1
        %s1225 = smul.addr %s1224, 16
        %s1226 = scalar_lea.vmem [#allocation11], %s1225
        // Predicated region
        $region69: #{tpu_custom_call.1} parent=51 // pred_check
          %p1227 = pneg %p230
        $region70: #{tpu_custom_call.1} parent=51 // pred_check_branch
          %1229 = sbr.rel (%p1227) target = $region72
        $region71: #{tpu_custom_call.1} parent=51 // pred_region
          %s1231 = ssub.s32 64, 64
          %1232 = vsyncadd %s1218, %s1231
          %s1233 = smul.addr %s34, 64
          %s1234 = scalar_lea.hbm %s8, %s1233
          %s1236 = sshll.u32 %s1221, 4
          %s1237 = int_to_ptr.vmem [resolvable:$true] %s1236
          %1239 = dma.vmem_to_hbm [thread:$0]  %s1237, 64, %s1234, %s1218
        $region72: #{tpu_custom_call.1} parent=51 // pred_fallthru
          _
        // Predicated region
        $region73: #{tpu_custom_call.1} parent=51 // pred_check
          %p1240 = pneg %p256
        $region74: #{tpu_custom_call.1} parent=51 // pred_check_branch
          %1242 = sbr.rel (%p1240) target = $region76
        $region75: #{tpu_custom_call.1} parent=51 // pred_region
          %s1244 = ssub.s32 256, 256
          %1245 = vsyncadd %s1223, %s1244
          %s1246 = smul.addr %s34, 4
          %s1247 = smul.addr %s1246, 64
          %s1248 = scalar_lea.hbm %s9, %s1247
          %s1249 = sshll.u32 %s1226, 4
          %s1250 = int_to_ptr.vmem [resolvable:$true] %s1249
          %1255 = dma.vmem_to_hbm [thread:$0]  %s1250, 256, %s1248, %s1223, 64, 64, 4
        $region76: #{tpu_custom_call.1} parent=51 // pred_fallthru
          _
      $region52: #{tpu_custom_call.1} parent=5 // pred_fallthru
        _
      %p1256 = scmp.le.s32.totalorder 2, %s29
      // Predicated region
      $region77: #{tpu_custom_call.1} parent=5 // pred_check
        %p1257 = pneg %p1256
      $region78: #{tpu_custom_call.1} parent=5 // pred_check_branch
        %1259 = sbr.rel (%p1257) target = $region80
      $region79: #{tpu_custom_call.1} parent=5 // pred_region
        %s1260 = ssub.s32 %s29, 2
        // Predicated region
        $region81: #{tpu_custom_call.1} parent=79 // pred_check
          %p1261 = pneg %p236
        $region82: #{tpu_custom_call.1} parent=79 // pred_check_branch
          %1263 = sbr.rel (%p1261) target = $region84
        $region83: #{tpu_custom_call.1} parent=79 // pred_region
          %s1264 = sand.u32 %s221, 1
          %s1265 = scalar_lea.sflag [#allocation4], %s1264
          %s1266 = sand.u32 %s221, 1
          %s1267 = smul.addr %s1266, 4
          %s1268 = scalar_lea.vmem [#allocation10], %s1267
          %1269 = dma.done %s1265, 64
        $region84: #{tpu_custom_call.1} parent=79 // pred_fallthru
          _
        // Predicated region
        $region85: #{tpu_custom_call.1} parent=79 // pred_check
          %p1270 = pneg %p262
        $region86: #{tpu_custom_call.1} parent=79 // pred_check_branch
          %1272 = sbr.rel (%p1270) target = $region88
        $region87: #{tpu_custom_call.1} parent=79 // pred_region
          %s1273 = sand.u32 %s247, 1
          %s1274 = scalar_lea.sflag [#allocation12], %s1273
          %s1275 = sand.u32 %s247, 1
          %s1276 = smul.addr %s1275, 16
          %s1277 = scalar_lea.vmem [#allocation11], %s1276
          %1278 = dma.done %s1274, 256
        $region88: #{tpu_custom_call.1} parent=79 // pred_fallthru
          _
      $region80: #{tpu_custom_call.1} parent=5 // pred_fallthru
        _
    $region6: #{tpu_custom_call.1} parent=1 // loop_footer
      %s33 = sadd.s32 1, %s29
    $region7: #{tpu_custom_call.1} parent=1 // loop_footer_branch
      %28 = sbr.rel target = $region3
    $region8: #{tpu_custom_call.1} parent=1 // loop_exit
      _
    %1279 = vsyncpa [#allocation3], 1
    %s1280 = scalar_lea.sflag [#allocation3], 1
    %1281 = vsyncpa %s1280, 1
    %1282 = vsyncpa [#allocation6], 1
    %s1283 = scalar_lea.sflag [#allocation6], 1
    %1284 = vsyncpa %s1283, 1
    %1285 = vsyncpa [#allocation9], 1
    %1286 = vsyncpa [#allocation4], 1
    %s1287 = scalar_lea.sflag [#allocation4], 1
    %1288 = vsyncpa %s1287, 1
    %1289 = vsyncpa [#allocation12], 1
    %s1290 = scalar_lea.sflag [#allocation12], 1
    %1291 = vsyncpa %s1290, 1

</llo_original>
